<compile_context>
chip_gen: v7x
topology: tpu7x:2x2x1
jax: 0.10.0
libtpu: 0.0.40
codegen_flags: <defaults>
</compile_context>

<pallas_src>
import jax
import jax.numpy as jnp
from jax import lax
from jax.experimental import pallas as pl
from jax.experimental.pallas import tpu as pltpu  # noqa: F401  (TPU backend)

# ---------------- configuration ----------------
DIM = 48                       # pair-repr channels (module default)
L = 16                         # sequence length (spatial size of the 2D map)
N_PIX = L * L                  # 256 flattened (i, j) positions
DIST_ATOMS = ["PP", "CC", "NN"]
CONT_ATOMS = ["PP"]
N_DIST = len(DIST_ATOMS)
N_CONT = len(CONT_ATOMS)
N_HEADS = N_DIST + N_CONT      # 4 heads, each in its own 128-lane slab
NBINS_DIST = 40
NBINS_CONT = 1
LANES = 128
IN_EPS = 1e-5                  # nn.InstanceNorm2d default eps
NEG_BIG = -1e30                # "minus infinity" bias for padded softmax lanes


# ---------------- Pallas kernel ----------------
def distogram_kernel(x_ref, xt_ref, gamma_ref, beta_ref, w_ref, b_ref, out_ref):
    # x_ref:   (N_PIX, DIM)        pair repr, rows = flattened (i, j)
    # xt_ref:  (N_PIX, DIM)        (i<->j)-swapped copy of the same map
    # gamma/beta: (1, DIM)         InstanceNorm2d affine params (affine=True)
    # w_ref:   (DIM, N_HEADS*128)  fused head weights, one 128-lane slab / head
    # b_ref:   (1, N_HEADS*128)    fused biases; distance pad lanes = NEG_BIG
    # out_ref: (N_HEADS, N_PIX, 128) lane-dense output; wrapper trims to bins
    x = x_ref[...]
    xt = xt_ref[...]

    # InstanceNorm2d (affine, biased variance): per-channel stats over the
    # spatial map.  Computed from x only — xt is a permutation of the same
    # values, so its stats are identical.
    mean = jnp.mean(x, axis=0, keepdims=True)                    # (1, D)
    var = jnp.mean((x - mean) ** 2, axis=0, keepdims=True)       # biased var
    inv = lax.rsqrt(var + IN_EPS)
    scale = gamma_ref[...] * inv                                 # fused affine
    shift = beta_ref[...] - mean * scale

    def norm_elu(v):
        y = v * scale + shift
        # ELU(alpha=1); exp(min(y,0)) keeps the unselected branch finite.
        return jnp.where(y > 0, y, jnp.exp(jnp.minimum(y, 0.0)) - 1.0)

    # Symm: 0.5 * (y + y^T_{ij}) applied after norm + ELU (elementwise ops
    # commute with the (i,j) permutation).
    ys = 0.5 * (norm_elu(x) + norm_elu(xt))                      # (N_PIX, D)

    # One fused MXU matmul for all heads: (256, 48) @ (48, 512).
    logits = jnp.dot(ys, w_ref[...],
                     preferred_element_type=jnp.float32) + b_ref[...]

    # Distance heads: softmax over their 128-lane slab.  Padded lanes carry a
    # -1e30 bias (zero weight) so exp() underflows to 0 and the normalization
    # over the real 40 bins is exact.
    for h in range(N_DIST):
        sl = logits[:, h * LANES:(h + 1) * LANES]                # aligned slab
        m = jnp.max(sl, axis=-1, keepdims=True)
        e = jnp.exp(sl - m)
        s = jnp.sum(e, axis=-1, keepdims=True)
        out_ref[h] = e * pl.reciprocal(s)                        # exact

    # Contact head(s): sigmoid; padded lanes are discarded by the wrapper.
    for h in range(N_CONT):
        c0 = (N_DIST + h) * LANES
        sl = logits[:, c0:c0 + LANES]
        out_ref[N_DIST + h] = pl.reciprocal(1.0 + jnp.exp(-sl))


# ---------------- parameter packing (runs ONCE per parameter set) ----------------
def pack_head_params(params):
    wd, bd, wc, bc = params["wd"], params["bd"], params["wc"], params["bc"]
    w = jnp.zeros((DIM, N_HEADS * LANES), jnp.float32)
    b = jnp.full((1, N_HEADS * LANES), NEG_BIG, jnp.float32)
    for h in range(N_DIST):
        c0 = h * LANES
        w = w.at[:, c0:c0 + NBINS_DIST].set(wd[h])
        b = b.at[0, c0:c0 + NBINS_DIST].set(bd[h, 0])
    for h in range(N_CONT):
        c0 = (N_DIST + h) * LANES
        w = w.at[:, c0:c0 + NBINS_CONT].set(wc[h])
        b = b.at[0, c0:c0 + LANES].set(0.0)          # sigmoid pad lanes: neutral
        b = b.at[0, c0:c0 + NBINS_CONT].set(bc[h, 0])
    return w, b


# ---------------- wrapper ----------------
def make_distogram(params):
    """Pack head weights once and return a jitted forward closure."""
    w_packed, b_packed = pack_head_params(params)
    gamma, beta = params["gamma"], params["beta"]

    @jax.jit
    def forward(pair_repr):
        """pair_repr: (1, L, L, D) float32.  Returns the nested prediction dict."""
        B, Li, Lj, D = pair_repr.shape
        assert B == 1 and Li == Lj == L and D == DIM

        # glue (inside the jit, so it fuses): flat map + its (i<->j) transpose
        x2 = pair_repr.reshape(N_PIX, D)
        xt2 = jnp.swapaxes(pair_repr, 1, 2).reshape(N_PIX, D)

        out = pl.pallas_call(
            distogram_kernel,
            out_shape=jax.ShapeDtypeStruct((N_HEADS, N_PIX, LANES), jnp.float32),
        )(x2, xt2, gamma, beta, w_packed, b_packed)

        pred = {"inter_labels": {"distance": {}, "contact": {}},
                "intra_labels": {}}
        for idx, a in enumerate(DIST_ATOMS):
            # .softmax(-1).squeeze(0) -> (L, L, NBINS_DIST)
            pred["inter_labels"]["distance"][a] = (
                out[idx, :, :NBINS_DIST].reshape(L, L, NBINS_DIST))
        for idx, a in enumerate(CONT_ATOMS):
            # .sigmoid().squeeze() -> (L, L)
            pred["inter_labels"]["contact"][a] = (
                out[N_DIST + idx, :, 0].reshape(L, L))
        return pred

    return forward


# ---------------- pure-JAX reference (for validation) ----------------
def distogram_reference(pair_repr, params):
    gamma, beta, wd, bd, wc, bc = (
        params["gamma"][0], params["beta"][0],
        params["wd"], params["bd"], params["wc"], params["bc"])
    xc = jnp.transpose(pair_repr, (0, 3, 1, 2))                  # b d i j
    mean = xc.mean(axis=(2, 3), keepdims=True)
    var = ((xc - mean) ** 2).mean(axis=(2, 3), keepdims=True)
    xn = (xc - mean) / jnp.sqrt(var + IN_EPS)
    xn = xn * gamma[None, :, None, None] + beta[None, :, None, None]
    xe = jnp.where(xn > 0, xn, jnp.exp(xn) - 1.0)
    y = jnp.transpose(xe, (0, 2, 3, 1))                          # b i j d
    ys = 0.5 * (y + jnp.transpose(y, (0, 2, 1, 3)))
    dist, cont = {}, {}
    for h, a in enumerate(DIST_ATOMS):
        logits = ys @ wd[h] + bd[h][0]
        dist[a] = jax.nn.softmax(logits, axis=-1)[0]
    for h, a in enumerate(CONT_ATOMS):
        logit = ys @ wc[h] + bc[h][0]
        cont[a] = jax.nn.sigmoid(logit)[0, :, :, 0]
    return dist, cont


# ---------------- deterministic parameter init ----------------
def init_params(key):
    ks = jax.random.split(key, 6)
    return {
        "gamma": 1.0 + 0.1 * jax.random.normal(ks[0], (1, DIM), jnp.float32),
        "beta": 0.1 * jax.random.normal(ks[1], (1, DIM), jnp.float32),
        "wd": 0.1 * jax.random.normal(ks[2], (N_DIST, DIM, NBINS_DIST), jnp.float32),
        "bd": 0.1 * jax.random.normal(ks[3], (N_DIST, 1, NBINS_DIST), jnp.float32),
        "wc": 0.1 * jax.random.normal(ks[4], (N_CONT, DIM, NBINS_CONT), jnp.float32),
        "bc": 0.1 * jax.random.normal(ks[5], (N_CONT, 1, NBINS_CONT), jnp.float32),
    }


if __name__ == "__main__":
    key = jax.random.PRNGKey(0)
    k_x, k_p = jax.random.split(key)
    pair_repr = jax.random.normal(k_x, (1, L, L, DIM), jnp.float32)
    params = init_params(k_p)

    distogram_forward = make_distogram(params)   # packs weights once, jits once
    pred = distogram_forward(pair_repr)
    jax.block_until_ready(pred)

    # validate against the plain-JAX reference
    dist_ref, cont_ref = distogram_reference(pair_repr, params)
    import numpy as np
    for a in DIST_ATOMS:
        got = np.asarray(pred["inter_labels"]["distance"][a])
        exp = np.asarray(dist_ref[a])
        assert got.shape == (L, L, NBINS_DIST)
        np.testing.assert_allclose(got, exp, atol=1e-4, rtol=1e-4)
    for a in CONT_ATOMS:
        got = np.asarray(pred["inter_labels"]["contact"][a])
        exp = np.asarray(cont_ref[a])
        assert got.shape == (L, L)
        np.testing.assert_allclose(got, exp, atol=1e-4, rtol=1e-4)

    print("KERNEL_OK")
</pallas_src>

<mosaic_0001>
module attributes {stable_mosaic.version = 11 : i64} {
  func.func @distogram_kernel(%arg0: memref<256x48xf32, #tpu.memory_space<vmem>>, %arg1: memref<256x48xf32, #tpu.memory_space<vmem>>, %arg2: memref<1x48xf32, #tpu.memory_space<vmem>>, %arg3: memref<1x48xf32, #tpu.memory_space<vmem>>, %arg4: memref<48x512xf32, #tpu.memory_space<vmem>>, %arg5: memref<1x512xf32, #tpu.memory_space<vmem>>, %arg6: memref<4x256x128xf32, #tpu.memory_space<vmem>>) attributes {dimension_semantics = [], scalar_prefetch = 0 : i64, scratch_operands = 0 : i64, tpu.core_type = #tpu.core_type<tc>} {
    %c0 = arith.constant 0 : index
    %c0_0 = arith.constant 0 : index
    %0 = vector.load %arg0[%c0, %c0_0] : memref<256x48xf32, #tpu.memory_space<vmem>>, vector<256x48xf32>
    %c0_1 = arith.constant 0 : index
    %c0_2 = arith.constant 0 : index
    %1 = vector.load %arg1[%c0_1, %c0_2] : memref<256x48xf32, #tpu.memory_space<vmem>>, vector<256x48xf32>
    %cst = arith.constant dense<0.000000e+00> : vector<48xf32>
    %2 = vector.multi_reduction <add>, %0, %cst [0] : vector<256x48xf32> to vector<48xf32>
    %3 = vector.shape_cast %2 : vector<48xf32> to vector<1x48xf32>
    %cst_3 = arith.constant 2.560000e+02 : f32
    %4 = vector.broadcast %cst_3 : f32 to vector<1x48xf32>
    %5 = arith.divf %3, %4 : vector<1x48xf32>
    %6 = vector.broadcast %5 : vector<1x48xf32> to vector<256x48xf32>
    %7 = arith.subf %0, %6 : vector<256x48xf32>
    %8 = arith.mulf %7, %7 : vector<256x48xf32>
    %cst_4 = arith.constant dense<0.000000e+00> : vector<48xf32>
    %9 = vector.multi_reduction <add>, %8, %cst_4 [0] : vector<256x48xf32> to vector<48xf32>
    %10 = vector.shape_cast %9 : vector<48xf32> to vector<1x48xf32>
    %cst_5 = arith.constant 2.560000e+02 : f32
    %11 = vector.broadcast %cst_5 : f32 to vector<1x48xf32>
    %12 = arith.divf %10, %11 : vector<1x48xf32>
    %cst_6 = arith.constant 9.99999974E-6 : f32
    %13 = vector.broadcast %cst_6 : f32 to vector<1x48xf32>
    %14 = arith.addf %12, %13 : vector<1x48xf32>
    %15 = math.rsqrt %14 : vector<1x48xf32>
    %c0_7 = arith.constant 0 : index
    %c0_8 = arith.constant 0 : index
    %16 = vector.load %arg2[%c0_7, %c0_8] : memref<1x48xf32, #tpu.memory_space<vmem>>, vector<1x48xf32>
    %17 = arith.mulf %16, %15 : vector<1x48xf32>
    %c0_9 = arith.constant 0 : index
    %c0_10 = arith.constant 0 : index
    %18 = vector.load %arg3[%c0_9, %c0_10] : memref<1x48xf32, #tpu.memory_space<vmem>>, vector<1x48xf32>
    %19 = arith.mulf %5, %17 : vector<1x48xf32>
    %20 = arith.subf %18, %19 : vector<1x48xf32>
    %21 = vector.broadcast %17 : vector<1x48xf32> to vector<256x48xf32>
    %22 = arith.mulf %0, %21 : vector<256x48xf32>
    %23 = vector.broadcast %20 : vector<1x48xf32> to vector<256x48xf32>
    %24 = arith.addf %22, %23 : vector<256x48xf32>
    %cst_11 = arith.constant 0.000000e+00 : f32
    %25 = vector.broadcast %cst_11 : f32 to vector<256x48xf32>
    %26 = arith.cmpf ogt, %24, %25 : vector<256x48xf32>
    %cst_12 = arith.constant 0.000000e+00 : f32
    %27 = vector.broadcast %cst_12 : f32 to vector<256x48xf32>
    %28 = arith.minimumf %24, %27 : vector<256x48xf32>
    %29 = math.exp %28 : vector<256x48xf32>
    %cst_13 = arith.constant 1.000000e+00 : f32
    %30 = vector.broadcast %cst_13 : f32 to vector<256x48xf32>
    %31 = arith.subf %29, %30 : vector<256x48xf32>
    %32 = arith.select %26, %24, %31 : vector<256x48xi1>, vector<256x48xf32>
    %33 = vector.broadcast %17 : vector<1x48xf32> to vector<256x48xf32>
    %34 = arith.mulf %1, %33 : vector<256x48xf32>
    %35 = vector.broadcast %20 : vector<1x48xf32> to vector<256x48xf32>
    %36 = arith.addf %34, %35 : vector<256x48xf32>
    %cst_14 = arith.constant 0.000000e+00 : f32
    %37 = vector.broadcast %cst_14 : f32 to vector<256x48xf32>
    %38 = arith.cmpf ogt, %36, %37 : vector<256x48xf32>
    %cst_15 = arith.constant 0.000000e+00 : f32
    %39 = vector.broadcast %cst_15 : f32 to vector<256x48xf32>
    %40 = arith.minimumf %36, %39 : vector<256x48xf32>
    %41 = math.exp %40 : vector<256x48xf32>
    %cst_16 = arith.constant 1.000000e+00 : f32
    %42 = vector.broadcast %cst_16 : f32 to vector<256x48xf32>
    %43 = arith.subf %41, %42 : vector<256x48xf32>
    %44 = arith.select %38, %36, %43 : vector<256x48xi1>, vector<256x48xf32>
    %45 = arith.addf %32, %44 : vector<256x48xf32>
    %cst_17 = arith.constant 5.000000e-01 : f32
    %46 = vector.broadcast %cst_17 : f32 to vector<256x48xf32>
    %47 = arith.mulf %46, %45 : vector<256x48xf32>
    %c0_18 = arith.constant 0 : index
    %c0_19 = arith.constant 0 : index
    %48 = vector.load %arg4[%c0_18, %c0_19] : memref<48x512xf32, #tpu.memory_space<vmem>>, vector<48x512xf32>
    %cst_20 = arith.constant dense<0.000000e+00> : vector<256x512xf32>
    %49 = tpu.matmul %47, %48, %cst_20 {dimension_numbers = #tpu.dot_dimension_numbers<[1], [0], [0], [1], [0, 0, 1, 1], [], []>} : vector<256x48xf32>, vector<48x512xf32>, vector<256x512xf32> -> vector<256x512xf32>
    %c0_21 = arith.constant 0 : index
    %c0_22 = arith.constant 0 : index
    %50 = vector.load %arg5[%c0_21, %c0_22] : memref<1x512xf32, #tpu.memory_space<vmem>>, vector<1x512xf32>
    %51 = vector.broadcast %50 : vector<1x512xf32> to vector<256x512xf32>
    %52 = arith.addf %49, %51 : vector<256x512xf32>
    %53 = vector.extract_strided_slice %52 {offsets = [0, 0], sizes = [256, 128], strides = [1, 1]} : vector<256x512xf32> to vector<256x128xf32>
    %cst_23 = arith.constant dense<0xFF800000> : vector<256xf32>
    %54 = vector.multi_reduction <maximumf>, %53, %cst_23 [1] : vector<256x128xf32> to vector<256xf32>
    %55 = vector.shape_cast %54 : vector<256xf32> to vector<256x1xf32>
    %56 = vector.broadcast %55 : vector<256x1xf32> to vector<256x128xf32>
    %57 = arith.subf %53, %56 : vector<256x128xf32>
    %58 = math.exp %57 : vector<256x128xf32>
    %cst_24 = arith.constant dense<0.000000e+00> : vector<256xf32>
    %59 = vector.multi_reduction <add>, %58, %cst_24 [1] : vector<256x128xf32> to vector<256xf32>
    %60 = vector.shape_cast %59 : vector<256xf32> to vector<256x1xf32>
    %61 = tpu.reciprocal %60 : vector<256x1xf32> -> vector<256x1xf32>
    %62 = vector.broadcast %61 : vector<256x1xf32> to vector<256x128xf32>
    %63 = arith.mulf %58, %62 : vector<256x128xf32>
    %c0_25 = arith.constant 0 : index
    %c0_26 = arith.constant 0 : index
    %c0_27 = arith.constant 0 : index
    %64 = vector.load %arg6[%c0_25, %c0_26, %c0_27] : memref<4x256x128xf32, #tpu.memory_space<vmem>>, vector<1x256x128xf32>
    %65 = vector.shape_cast %64 : vector<1x256x128xf32> to vector<256x128xf32>
    %66 = vector.shape_cast %63 : vector<256x128xf32> to vector<1x256x128xf32>
    tpu.vector_store %arg6[%c0_25, %c0_26, %c0_27], %66 {strides = array<i32>} : memref<4x256x128xf32, #tpu.memory_space<vmem>>, vector<1x256x128xf32>,
    %67 = vector.extract_strided_slice %52 {offsets = [0, 128], sizes = [256, 128], strides = [1, 1]} : vector<256x512xf32> to vector<256x128xf32>
    %cst_28 = arith.constant dense<0xFF800000> : vector<256xf32>
    %68 = vector.multi_reduction <maximumf>, %67, %cst_28 [1] : vector<256x128xf32> to vector<256xf32>
    %69 = vector.shape_cast %68 : vector<256xf32> to vector<256x1xf32>
    %70 = vector.broadcast %69 : vector<256x1xf32> to vector<256x128xf32>
    %71 = arith.subf %67, %70 : vector<256x128xf32>
    %72 = math.exp %71 : vector<256x128xf32>
    %cst_29 = arith.constant dense<0.000000e+00> : vector<256xf32>
    %73 = vector.multi_reduction <add>, %72, %cst_29 [1] : vector<256x128xf32> to vector<256xf32>
    %74 = vector.shape_cast %73 : vector<256xf32> to vector<256x1xf32>
    %75 = tpu.reciprocal %74 : vector<256x1xf32> -> vector<256x1xf32>
    %76 = vector.broadcast %75 : vector<256x1xf32> to vector<256x128xf32>
    %77 = arith.mulf %72, %76 : vector<256x128xf32>
    %c1 = arith.constant 1 : index
    %c0_30 = arith.constant 0 : index
    %c0_31 = arith.constant 0 : index
    %78 = vector.load %arg6[%c1, %c0_30, %c0_31] : memref<4x256x128xf32, #tpu.memory_space<vmem>>, vector<1x256x128xf32>
    %79 = vector.shape_cast %78 : vector<1x256x128xf32> to vector<256x128xf32>
    %80 = vector.shape_cast %77 : vector<256x128xf32> to vector<1x256x128xf32>
    tpu.vector_store %arg6[%c1, %c0_30, %c0_31], %80 {strides = array<i32>} : memref<4x256x128xf32, #tpu.memory_space<vmem>>, vector<1x256x128xf32>,
    %81 = vector.extract_strided_slice %52 {offsets = [0, 256], sizes = [256, 128], strides = [1, 1]} : vector<256x512xf32> to vector<256x128xf32>
    %cst_32 = arith.constant dense<0xFF800000> : vector<256xf32>
    %82 = vector.multi_reduction <maximumf>, %81, %cst_32 [1] : vector<256x128xf32> to vector<256xf32>
    %83 = vector.shape_cast %82 : vector<256xf32> to vector<256x1xf32>
    %84 = vector.broadcast %83 : vector<256x1xf32> to vector<256x128xf32>
    %85 = arith.subf %81, %84 : vector<256x128xf32>
    %86 = math.exp %85 : vector<256x128xf32>
    %cst_33 = arith.constant dense<0.000000e+00> : vector<256xf32>
    %87 = vector.multi_reduction <add>, %86, %cst_33 [1] : vector<256x128xf32> to vector<256xf32>
    %88 = vector.shape_cast %87 : vector<256xf32> to vector<256x1xf32>
    %89 = tpu.reciprocal %88 : vector<256x1xf32> -> vector<256x1xf32>
    %90 = vector.broadcast %89 : vector<256x1xf32> to vector<256x128xf32>
    %91 = arith.mulf %86, %90 : vector<256x128xf32>
    %c2 = arith.constant 2 : index
    %c0_34 = arith.constant 0 : index
    %c0_35 = arith.constant 0 : index
    %92 = vector.load %arg6[%c2, %c0_34, %c0_35] : memref<4x256x128xf32, #tpu.memory_space<vmem>>, vector<1x256x128xf32>
    %93 = vector.shape_cast %92 : vector<1x256x128xf32> to vector<256x128xf32>
    %94 = vector.shape_cast %91 : vector<256x128xf32> to vector<1x256x128xf32>
    tpu.vector_store %arg6[%c2, %c0_34, %c0_35], %94 {strides = array<i32>} : memref<4x256x128xf32, #tpu.memory_space<vmem>>, vector<1x256x128xf32>,
    %95 = vector.extract_strided_slice %52 {offsets = [0, 384], sizes = [256, 128], strides = [1, 1]} : vector<256x512xf32> to vector<256x128xf32>
    %cst_36 = arith.constant 0.000000e+00 : f32
    %96 = vector.broadcast %cst_36 : f32 to vector<256x128xf32>
    %97 = arith.subf %96, %95 : vector<256x128xf32>
    %98 = math.exp %97 : vector<256x128xf32>
    %cst_37 = arith.constant 1.000000e+00 : f32
    %99 = vector.broadcast %cst_37 : f32 to vector<256x128xf32>
    %100 = arith.addf %99, %98 : vector<256x128xf32>
    %101 = tpu.reciprocal %100 : vector<256x128xf32> -> vector<256x128xf32>
    %c3 = arith.constant 3 : index
    %c0_38 = arith.constant 0 : index
    %c0_39 = arith.constant 0 : index
    %102 = vector.load %arg6[%c3, %c0_38, %c0_39] : memref<4x256x128xf32, #tpu.memory_space<vmem>>, vector<1x256x128xf32>
    %103 = vector.shape_cast %102 : vector<1x256x128xf32> to vector<256x128xf32>
    %104 = vector.shape_cast %101 : vector<256x128xf32> to vector<1x256x128xf32>
    tpu.vector_store %arg6[%c3, %c0_38, %c0_39], %104 {strides = array<i32>} : memref<4x256x128xf32, #tpu.memory_space<vmem>>, vector<1x256x128xf32>,
    return
  }
}

</mosaic_0001>

<llo_original>
// kernel: squeeze.7
$region0: #{squeeze.7}
  %s0 = inlined_call_operand.vmem [shape: f32[256], index: 0, kind: input, shape index: {}]
  %s1 = inlined_call_operand.hbm [shape: f32[16,16], index: 1, kind: output, shape index: {}]
  $region1: #{squeeze.7} parent=0
    #allocation0 [shape = 'u8[8192]{0}', space=vmem, size = 0x2000, scoped, tag = 'operand span for operand 1']
    #allocation1 [shape = 's32[1]{0}', space=sflag, size = 0x4, scoped, tag = 'scoped memory for squeeze.7']
    #allocation2 [shape = 'u8[4096]{0}', space=vmem, size = 0x1000, scoped, tag = 'scoped mem for input reshape']
    %2 = vsyncpa [#allocation1], 0
    %s4 = sshllo.u32 0, 2
    %v5 = vld [vmem:[%s0] sm:%s4]
    %6 = vst [vmem:[#allocation2] sm:%s4] %v5
    %v7 = vld [vmem:[#allocation2] sm:$0x3]
    %vm8 = vcmask 130048
    %9 = vst.msk [vmem:[#allocation0] ss:$8 sm:$0x3] %vm8, %v7
    %v10 = vld [vmem:[#allocation2] sm:$0x3]
    %11 = vrot.lane.b32.xlu0 %v10, 112
    %v12 = vpop.permute.xlu0 %11
    %vm13 = vcmask 130048
    %s14 = scalar_lea.vmem [#allocation0], 1
    %15 = vst.msk [vmem:[%s14] ss:$8 sm:$0x3] %vm13, %v12
    %v16 = vld [vmem:[#allocation2] sm:$0x3]
    %17 = vrot.lane.b32.xlu0 %v16, 96
    %v18 = vpop.permute.xlu0 %17
    %vm19 = vcmask 130048
    %s20 = scalar_lea.vmem [#allocation0], 2
    %21 = vst.msk [vmem:[%s20] ss:$8 sm:$0x3] %vm19, %v18
    %v22 = vld [vmem:[#allocation2] sm:$0x3]
    %23 = vrot.lane.b32.xlu0 %v22, 80
    %v24 = vpop.permute.xlu0 %23
    %vm25 = vcmask 130048
    %s26 = scalar_lea.vmem [#allocation0], 3
    %27 = vst.msk [vmem:[%s26] ss:$8 sm:$0x3] %vm25, %v24
    %v28 = vld [vmem:[#allocation2] sm:$0x3]
    %29 = vrot.lane.b32.xlu0 %v28, 64
    %v30 = vpop.permute.xlu0 %29
    %vm31 = vcmask 130048
    %s32 = scalar_lea.vmem [#allocation0], 4
    %33 = vst.msk [vmem:[%s32] ss:$8 sm:$0x3] %vm31, %v30
    %v34 = vld [vmem:[#allocation2] sm:$0x3]
    %35 = vrot.lane.b32.xlu0 %v34, 48
    %v36 = vpop.permute.xlu0 %35
    %vm37 = vcmask 130048
    %s38 = scalar_lea.vmem [#allocation0], 5
    %39 = vst.msk [vmem:[%s38] ss:$8 sm:$0x3] %vm37, %v36
    %v40 = vld [vmem:[#allocation2] sm:$0x3]
    %41 = vrot.lane.b32.xlu0 %v40, 32
    %v42 = vpop.permute.xlu0 %41
    %vm43 = vcmask 130048
    %s44 = scalar_lea.vmem [#allocation0], 6
    %45 = vst.msk [vmem:[%s44] ss:$8 sm:$0x3] %vm43, %v42
    %v46 = vld [vmem:[#allocation2] sm:$0x3]
    %47 = vrot.lane.b32.xlu0 %v46, 16
    %v48 = vpop.permute.xlu0 %47
    %vm49 = vcmask 130048
    %s50 = scalar_lea.vmem [#allocation0], 7
    %51 = vst.msk [vmem:[%s50] ss:$8 sm:$0x3] %vm49, %v48
    %s53 = ssub.s32 256, 256
    %54 = vsyncadd [#allocation1], %s53
    %s56 = sshll.u32 [#allocation0], 4
    %s57 = int_to_ptr.vmem [resolvable:$true] %s56
    %59 = dma.vmem_to_hbm [thread:$0]  %s57, 256, %s1, [#allocation1]
    %60 = dma.done [#allocation1], 256
    %61 = vsyncpa [#allocation1], 1

// kernel: forward.1
$region0: #{forward.1}
  #allocation0 [shape = 'u32[]', space=smem, size = 0x4, offset = 0x4, fixed_abs, tag = 'smem constant byte address 0x4 - core index']
  #allocation1 [shape = 'u32[144,128]{1,0:T(1,128)}', space=vmem, size = 0x12000, scoped, tag = 'internal scratch']
  %s0 = inlined_call_operand.vmem [shape: f32[256,48], index: 0, kind: input, shape index: {}]
  %s1 = inlined_call_operand.vmem [shape: f32[256,48], index: 1, kind: input, shape index: {}]
  %s2 = inlined_call_operand.vmem [shape: f32[1,48], index: 2, kind: input, shape index: {}]
  %s3 = inlined_call_operand.vmem [shape: f32[1,48], index: 3, kind: input, shape index: {}]
  %s4 = inlined_call_operand.vmem [shape: f32[48,512], index: 4, kind: input, shape index: {}]
  %s5 = inlined_call_operand.vmem [shape: f32[1,512], index: 5, kind: input, shape index: {}]
  %s6 = inlined_call_operand.vmem [shape: f32[4,256,128], index: 6, kind: output, shape index: {}]
  %s7 = sld [smem:[#allocation0]]
  $region34: #{forward.1} parent=0
    _
  %s9 = ssub.s32 1, %s7
  %s10 = scalar_select 0, %s9, %s7
  // Predicated region
  $region2: #{forward.1} parent=0 // pred_check
    _
  $region3: #{forward.1} parent=0 // pred_check_branch
    %12 = sbr.rel (0) target = $region5
  $region4: #{forward.1} parent=0 // pred_region
    _
  $region5: #{forward.1} parent=0 // pred_fallthru
    _
  // Predicated region
  $region6: #{forward.1} parent=0 // pred_check
    _
  $region7: #{forward.1} parent=0 // pred_check_branch
    %14 = sbr.rel (0) target = $region9
  $region8: #{forward.1} parent=0 // pred_region
    _
  $region9: #{forward.1} parent=0 // pred_fallthru
    _
  // Predicated region
  $region10: #{forward.1} parent=0 // pred_check
    _
  $region11: #{forward.1} parent=0 // pred_check_branch
    %16 = sbr.rel (0) target = $region13
  $region12: #{forward.1} parent=0 // pred_region
    _
  $region13: #{forward.1} parent=0 // pred_fallthru
    _
  // Predicated region
  $region14: #{forward.1} parent=0 // pred_check
    _
  $region15: #{forward.1} parent=0 // pred_check_branch
    %18 = sbr.rel (0) target = $region17
  $region16: #{forward.1} parent=0 // pred_region
    _
  $region17: #{forward.1} parent=0 // pred_fallthru
    _
  // Predicated region
  $region18: #{forward.1} parent=0 // pred_check
    _
  $region19: #{forward.1} parent=0 // pred_check_branch
    %20 = sbr.rel (0) target = $region21
  $region20: #{forward.1} parent=0 // pred_region
    _
  $region21: #{forward.1} parent=0 // pred_fallthru
    _
  // Predicated region
  $region22: #{forward.1} parent=0 // pred_check
    _
  $region23: #{forward.1} parent=0 // pred_check_branch
    %22 = sbr.rel (0) target = $region25
  $region24: #{forward.1} parent=0 // pred_region
    _
  $region25: #{forward.1} parent=0 // pred_fallthru
    _
  %v23 = vld [vmem:[%s0] sm:$0xff]
  %v24 = vld [vmem:[%s0 + $0x8] sm:$0xff]
  %v25 = vld [vmem:[%s0 + $0x10] sm:$0xff]
  %v26 = vld [vmem:[%s0 + $0x18] sm:$0xff]
  %v27 = vld [vmem:[%s0 + $0x20] sm:$0xff]
  %v28 = vld [vmem:[%s0 + $0x28] sm:$0xff]
  %v29 = vld [vmem:[%s0 + $0x30] sm:$0xff]
  %v30 = vld [vmem:[%s0 + $0x38] sm:$0xff]
  %v31 = vld [vmem:[%s0 + $0x40] sm:$0xff]
  %v32 = vld [vmem:[%s0 + $0x48] sm:$0xff]
  %v33 = vld [vmem:[%s0 + $0x50] sm:$0xff]
  %v34 = vld [vmem:[%s0 + $0x58] sm:$0xff]
  %v35 = vld [vmem:[%s0 + $0x60] sm:$0xff]
  %v36 = vld [vmem:[%s0 + $0x68] sm:$0xff]
  %v37 = vld [vmem:[%s0 + $0x70] sm:$0xff]
  %v38 = vld [vmem:[%s0 + $0x78] sm:$0xff]
  %v39 = vld [vmem:[%s0 + $0x80] sm:$0xff]
  %v40 = vld [vmem:[%s0 + $0x88] sm:$0xff]
  %v41 = vld [vmem:[%s0 + $0x90] sm:$0xff]
  %v42 = vld [vmem:[%s0 + $0x98] sm:$0xff]
  %v43 = vld [vmem:[%s0 + $0xa0] sm:$0xff]
  %v44 = vld [vmem:[%s0 + $0xa8] sm:$0xff]
  %v45 = vld [vmem:[%s0 + $0xb0] sm:$0xff]
  %v46 = vld [vmem:[%s0 + $0xb8] sm:$0xff]
  %v47 = vld [vmem:[%s0 + $0xc0] sm:$0xff]
  %v48 = vld [vmem:[%s0 + $0xc8] sm:$0xff]
  %v49 = vld [vmem:[%s0 + $0xd0] sm:$0xff]
  %v50 = vld [vmem:[%s0 + $0xd8] sm:$0xff]
  %v51 = vld [vmem:[%s0 + $0xe0] sm:$0xff]
  %v52 = vld [vmem:[%s0 + $0xe8] sm:$0xff]
  %v53 = vld [vmem:[%s0 + $0xf0] sm:$0xff]
  %v54 = vld [vmem:[%s0 + $0xf8] sm:$0xff]
  %v55 = vld [vmem:[%s1] sm:$0xff]
  %v56 = vld [vmem:[%s1 + $0x8] sm:$0xff]
  %v57 = vld [vmem:[%s1 + $0x10] sm:$0xff]
  %v58 = vld [vmem:[%s1 + $0x18] sm:$0xff]
  %v59 = vld [vmem:[%s1 + $0x20] sm:$0xff]
  %v60 = vld [vmem:[%s1 + $0x28] sm:$0xff]
  %v61 = vld [vmem:[%s1 + $0x30] sm:$0xff]
  %v62 = vld [vmem:[%s1 + $0x38] sm:$0xff]
  %v63 = vld [vmem:[%s1 + $0x40] sm:$0xff]
  %v64 = vld [vmem:[%s1 + $0x48] sm:$0xff]
  %v65 = vld [vmem:[%s1 + $0x50] sm:$0xff]
  %v66 = vld [vmem:[%s1 + $0x58] sm:$0xff]
  %v67 = vld [vmem:[%s1 + $0x60] sm:$0xff]
  %v68 = vld [vmem:[%s1 + $0x68] sm:$0xff]
  %v69 = vld [vmem:[%s1 + $0x70] sm:$0xff]
  %v70 = vld [vmem:[%s1 + $0x78] sm:$0xff]
  %v71 = vld [vmem:[%s1 + $0x80] sm:$0xff]
  %v72 = vld [vmem:[%s1 + $0x88] sm:$0xff]
  %v73 = vld [vmem:[%s1 + $0x90] sm:$0xff]
  %v74 = vld [vmem:[%s1 + $0x98] sm:$0xff]
  %v75 = vld [vmem:[%s1 + $0xa0] sm:$0xff]
  %v76 = vld [vmem:[%s1 + $0xa8] sm:$0xff]
  %v77 = vld [vmem:[%s1 + $0xb0] sm:$0xff]
  %v78 = vld [vmem:[%s1 + $0xb8] sm:$0xff]
  %v79 = vld [vmem:[%s1 + $0xc0] sm:$0xff]
  %v80 = vld [vmem:[%s1 + $0xc8] sm:$0xff]
  %v81 = vld [vmem:[%s1 + $0xd0] sm:$0xff]
  %v82 = vld [vmem:[%s1 + $0xd8] sm:$0xff]
  %v83 = vld [vmem:[%s1 + $0xe0] sm:$0xff]
  %v84 = vld [vmem:[%s1 + $0xe8] sm:$0xff]
  %v85 = vld [vmem:[%s1 + $0xf0] sm:$0xff]
  %v86 = vld [vmem:[%s1 + $0xf8] sm:$0xff]
  %vm87 = vcmask 392192
  %v88 = vsel %vm87, %v23, 0.0
  %v89 = vsel %vm87, %v24, 0.0
  %v90 = vadd.f32 %v88, %v89
  %v91 = vsel %vm87, %v25, 0.0
  %v92 = vadd.f32 %v90, %v91
  %v93 = vsel %vm87, %v26, 0.0
  %v94 = vadd.f32 %v92, %v93
  %v95 = vsel %vm87, %v27, 0.0
  %v96 = vadd.f32 %v94, %v95
  %v97 = vsel %vm87, %v28, 0.0
  %v98 = vadd.f32 %v96, %v97
  %v99 = vsel %vm87, %v29, 0.0
  %v100 = vadd.f32 %v98, %v99
  %v101 = vsel %vm87, %v30, 0.0
  %v102 = vadd.f32 %v100, %v101
  %v103 = vsel %vm87, %v31, 0.0
  %v104 = vadd.f32 %v102, %v103
  %v105 = vsel %vm87, %v32, 0.0
  %v106 = vadd.f32 %v104, %v105
  %v107 = vsel %vm87, %v33, 0.0
  %v108 = vadd.f32 %v106, %v107
  %v109 = vsel %vm87, %v34, 0.0
  %v110 = vadd.f32 %v108, %v109
  %v111 = vsel %vm87, %v35, 0.0
  %v112 = vadd.f32 %v110, %v111
  %v113 = vsel %vm87, %v36, 0.0
  %v114 = vadd.f32 %v112, %v113
  %v115 = vsel %vm87, %v37, 0.0
  %v116 = vadd.f32 %v114, %v115
  %v117 = vsel %vm87, %v38, 0.0
  %v118 = vadd.f32 %v116, %v117
  %v119 = vsel %vm87, %v39, 0.0
  %v120 = vadd.f32 %v118, %v119
  %v121 = vsel %vm87, %v40, 0.0
  %v122 = vadd.f32 %v120, %v121
  %v123 = vsel %vm87, %v41, 0.0
  %v124 = vadd.f32 %v122, %v123
  %v125 = vsel %vm87, %v42, 0.0
  %v126 = vadd.f32 %v124, %v125
  %v127 = vsel %vm87, %v43, 0.0
  %v128 = vadd.f32 %v126, %v127
  %v129 = vsel %vm87, %v44, 0.0
  %v130 = vadd.f32 %v128, %v129
  %v131 = vsel %vm87, %v45, 0.0
  %v132 = vadd.f32 %v130, %v131
  %v133 = vsel %vm87, %v46, 0.0
  %v134 = vadd.f32 %v132, %v133
  %v135 = vsel %vm87, %v47, 0.0
  %v136 = vadd.f32 %v134, %v135
  %v137 = vsel %vm87, %v48, 0.0
  %v138 = vadd.f32 %v136, %v137
  %v139 = vsel %vm87, %v49, 0.0
  %v140 = vadd.f32 %v138, %v139
  %v141 = vsel %vm87, %v50, 0.0
  %v142 = vadd.f32 %v140, %v141
  %v143 = vsel %vm87, %v51, 0.0
  %v144 = vadd.f32 %v142, %v143
  %v145 = vsel %vm87, %v52, 0.0
  %v146 = vadd.f32 %v144, %v145
  %v147 = vsel %vm87, %v53, 0.0
  %v148 = vadd.f32 %v146, %v147
  %v149 = vsel %vm87, %v54, 0.0
  %v150 = vadd.f32 %v148, %v149
  %v151 = vrot.slane %v150, 4
  %v152 = vadd.f32 %v150, %v151
  %v153 = vrot.slane %v152, 2
  %v154 = vadd.f32 %v152, %v153
  %v155 = vrot.slane %v154, 1
  %v156 = vadd.f32 %v154, %v155
  %v157 = vrcp.pop 256.0
  %v158 = vmul.f32 %v156, %v157
  %v159 = vsub.f32 %v23, %v158
  %v160 = vsub.f32 %v24, %v158
  %v161 = vsub.f32 %v25, %v158
  %v162 = vsub.f32 %v26, %v158
  %v163 = vsub.f32 %v27, %v158
  %v164 = vsub.f32 %v28, %v158
  %v165 = vsub.f32 %v29, %v158
  %v166 = vsub.f32 %v30, %v158
  %v167 = vsub.f32 %v31, %v158
  %v168 = vsub.f32 %v32, %v158
  %v169 = vsub.f32 %v33, %v158
  %v170 = vsub.f32 %v34, %v158
  %v171 = vsub.f32 %v35, %v158
  %v172 = vsub.f32 %v36, %v158
  %v173 = vsub.f32 %v37, %v158
  %v174 = vsub.f32 %v38, %v158
  %v175 = vsub.f32 %v39, %v158
  %v176 = vsub.f32 %v40, %v158
  %v177 = vsub.f32 %v41, %v158
  %v178 = vsub.f32 %v42, %v158
  %v179 = vsub.f32 %v43, %v158
  %v180 = vsub.f32 %v44, %v158
  %v181 = vsub.f32 %v45, %v158
  %v182 = vsub.f32 %v46, %v158
  %v183 = vsub.f32 %v47, %v158
  %v184 = vsub.f32 %v48, %v158
  %v185 = vsub.f32 %v49, %v158
  %v186 = vsub.f32 %v50, %v158
  %v187 = vsub.f32 %v51, %v158
  %v188 = vsub.f32 %v52, %v158
  %v189 = vsub.f32 %v53, %v158
  %v190 = vsub.f32 %v54, %v158
  %v191 = vmul.f32 %v159, %v159
  %v192 = vmul.f32 %v160, %v160
  %v193 = vmul.f32 %v161, %v161
  %v194 = vmul.f32 %v162, %v162
  %v195 = vmul.f32 %v163, %v163
  %v196 = vmul.f32 %v164, %v164
  %v197 = vmul.f32 %v165, %v165
  %v198 = vmul.f32 %v166, %v166
  %v199 = vmul.f32 %v167, %v167
  %v200 = vmul.f32 %v168, %v168
  %v201 = vmul.f32 %v169, %v169
  %v202 = vmul.f32 %v170, %v170
  %v203 = vmul.f32 %v171, %v171
  %v204 = vmul.f32 %v172, %v172
  %v205 = vmul.f32 %v173, %v173
  %v206 = vmul.f32 %v174, %v174
  %v207 = vmul.f32 %v175, %v175
  %v208 = vmul.f32 %v176, %v176
  %v209 = vmul.f32 %v177, %v177
  %v210 = vmul.f32 %v178, %v178
  %v211 = vmul.f32 %v179, %v179
  %v212 = vmul.f32 %v180, %v180
  %v213 = vmul.f32 %v181, %v181
  %v214 = vmul.f32 %v182, %v182
  %v215 = vmul.f32 %v183, %v183
  %v216 = vmul.f32 %v184, %v184
  %v217 = vmul.f32 %v185, %v185
  %v218 = vmul.f32 %v186, %v186
  %v219 = vmul.f32 %v187, %v187
  %v220 = vmul.f32 %v188, %v188
  %v221 = vmul.f32 %v189, %v189
  %v222 = vmul.f32 %v190, %v190
  %v223 = vsel %vm87, %v191, 0.0
  %v224 = vsel %vm87, %v192, 0.0
  %v225 = vadd.f32 %v223, %v224
  %v226 = vsel %vm87, %v193, 0.0
  %v227 = vadd.f32 %v225, %v226
  %v228 = vsel %vm87, %v194, 0.0
  %v229 = vadd.f32 %v227, %v228
  %v230 = vsel %vm87, %v195, 0.0
  %v231 = vadd.f32 %v229, %v230
  %v232 = vsel %vm87, %v196, 0.0
  %v233 = vadd.f32 %v231, %v232
  %v234 = vsel %vm87, %v197, 0.0
  %v235 = vadd.f32 %v233, %v234
  %v236 = vsel %vm87, %v198, 0.0
  %v237 = vadd.f32 %v235, %v236
  %v238 = vsel %vm87, %v199, 0.0
  %v239 = vadd.f32 %v237, %v238
  %v240 = vsel %vm87, %v200, 0.0
  %v241 = vadd.f32 %v239, %v240
  %v242 = vsel %vm87, %v201, 0.0
  %v243 = vadd.f32 %v241, %v242
  %v244 = vsel %vm87, %v202, 0.0
  %v245 = vadd.f32 %v243, %v244
  %v246 = vsel %vm87, %v203, 0.0
  %v247 = vadd.f32 %v245, %v246
  %v248 = vsel %vm87, %v204, 0.0
  %v249 = vadd.f32 %v247, %v248
  %v250 = vsel %vm87, %v205, 0.0
  %v251 = vadd.f32 %v249, %v250
  %v252 = vsel %vm87, %v206, 0.0
  %v253 = vadd.f32 %v251, %v252
  %v254 = vsel %vm87, %v207, 0.0
  %v255 = vadd.f32 %v253, %v254
  %v256 = vsel %vm87, %v208, 0.0
  %v257 = vadd.f32 %v255, %v256
  %v258 = vsel %vm87, %v209, 0.0
  %v259 = vadd.f32 %v257, %v258
  %v260 = vsel %vm87, %v210, 0.0
  %v261 = vadd.f32 %v259, %v260
  %v262 = vsel %vm87, %v211, 0.0
  %v263 = vadd.f32 %v261, %v262
  %v264 = vsel %vm87, %v212, 0.0
  %v265 = vadd.f32 %v263, %v264
  %v266 = vsel %vm87, %v213, 0.0
  %v267 = vadd.f32 %v265, %v266
  %v268 = vsel %vm87, %v214, 0.0
  %v269 = vadd.f32 %v267, %v268
  %v270 = vsel %vm87, %v215, 0.0
  %v271 = vadd.f32 %v269, %v270
  %v272 = vsel %vm87, %v216, 0.0
  %v273 = vadd.f32 %v271, %v272
  %v274 = vsel %vm87, %v217, 0.0
  %v275 = vadd.f32 %v273, %v274
  %v276 = vsel %vm87, %v218, 0.0
  %v277 = vadd.f32 %v275, %v276
  %v278 = vsel %vm87, %v219, 0.0
  %v279 = vadd.f32 %v277, %v278
  %v280 = vsel %vm87, %v220, 0.0
  %v281 = vadd.f32 %v279, %v280
  %v282 = vsel %vm87, %v221, 0.0
  %v283 = vadd.f32 %v281, %v282
  %v284 = vsel %vm87, %v222, 0.0
  %v285 = vadd.f32 %v283, %v284
  %v286 = vrot.slane %v285, 4
  %v287 = vadd.f32 %v285, %v286
  %v288 = vrot.slane %v287, 2
  %v289 = vadd.f32 %v287, %v288
  %v290 = vrot.slane %v289, 1
  %v291 = vadd.f32 %v289, %v290
  %v292 = vmul.f32 %v291, %v157
  %v293 = vadd.f32 %v292, 1e-05
  %v294 = vrsqrt.pop %v293
  %v295 = vld [vmem:[%s2] sm:$0x1]
  %v296 = vmul.f32 %v295, %v294
  %v297 = vld [vmem:[%s3] sm:$0x1]
  %v298 = vmul.f32 %v158, %v296
  %v299 = vsub.f32 %v297, %v298
  %v301 = vlaneseq
  %v302 = vshrl.u32 %v301, 7
  %v303 = vsub.s32 0, %v302
  %v304 = vrot.slane %v296, %v303
  %v306 = vmul.f32 %v23, %v304
  %v307 = vmul.f32 %v24, %v304
  %v308 = vmul.f32 %v25, %v304
  %v309 = vmul.f32 %v26, %v304
  %v310 = vmul.f32 %v27, %v304
  %v311 = vmul.f32 %v28, %v304
  %v312 = vmul.f32 %v29, %v304
  %v313 = vmul.f32 %v30, %v304
  %v314 = vmul.f32 %v31, %v304
  %v315 = vmul.f32 %v32, %v304
  %v316 = vmul.f32 %v33, %v304
  %v317 = vmul.f32 %v34, %v304
  %v318 = vmul.f32 %v35, %v304
  %v319 = vmul.f32 %v36, %v304
  %v320 = vmul.f32 %v37, %v304
  %v321 = vmul.f32 %v38, %v304
  %v322 = vmul.f32 %v39, %v304
  %v323 = vmul.f32 %v40, %v304
  %v324 = vmul.f32 %v41, %v304
  %v325 = vmul.f32 %v42, %v304
  %v326 = vmul.f32 %v43, %v304
  %v327 = vmul.f32 %v44, %v304
  %v328 = vmul.f32 %v45, %v304
  %v329 = vmul.f32 %v46, %v304
  %v330 = vmul.f32 %v47, %v304
  %v331 = vmul.f32 %v48, %v304
  %v332 = vmul.f32 %v49, %v304
  %v333 = vmul.f32 %v50, %v304
  %v334 = vmul.f32 %v51, %v304
  %v335 = vmul.f32 %v52, %v304
  %v336 = vmul.f32 %v53, %v304
  %v337 = vmul.f32 %v54, %v304
  %v339 = vlaneseq
  %v340 = vshrl.u32 %v339, 7
  %v341 = vsub.s32 0, %v340
  %v342 = vrot.slane %v299, %v341
  %v344 = vadd.f32 %v306, %v342
  %v345 = vadd.f32 %v307, %v342
  %v346 = vadd.f32 %v308, %v342
  %v347 = vadd.f32 %v309, %v342
  %v348 = vadd.f32 %v310, %v342
  %v349 = vadd.f32 %v311, %v342
  %v350 = vadd.f32 %v312, %v342
  %v351 = vadd.f32 %v313, %v342
  %v352 = vadd.f32 %v314, %v342
  %v353 = vadd.f32 %v315, %v342
  %v354 = vadd.f32 %v316, %v342
  %v355 = vadd.f32 %v317, %v342
  %v356 = vadd.f32 %v318, %v342
  %v357 = vadd.f32 %v319, %v342
  %v358 = vadd.f32 %v320, %v342
  %v359 = vadd.f32 %v321, %v342
  %v360 = vadd.f32 %v322, %v342
  %v361 = vadd.f32 %v323, %v342
  %v362 = vadd.f32 %v324, %v342
  %v363 = vadd.f32 %v325, %v342
  %v364 = vadd.f32 %v326, %v342
  %v365 = vadd.f32 %v327, %v342
  %v366 = vadd.f32 %v328, %v342
  %v367 = vadd.f32 %v329, %v342
  %v368 = vadd.f32 %v330, %v342
  %v369 = vadd.f32 %v331, %v342
  %v370 = vadd.f32 %v332, %v342
  %v371 = vadd.f32 %v333, %v342
  %v372 = vadd.f32 %v334, %v342
  %v373 = vadd.f32 %v335, %v342
  %v374 = vadd.f32 %v336, %v342
  %v375 = vadd.f32 %v337, %v342
  %vm376 = vcmp.gt.f32.partialorder %v344, 0.0
  %vm377 = vcmp.gt.f32.partialorder %v345, 0.0
  %vm378 = vcmp.gt.f32.partialorder %v346, 0.0
  %vm379 = vcmp.gt.f32.partialorder %v347, 0.0
  %vm380 = vcmp.gt.f32.partialorder %v348, 0.0
  %vm381 = vcmp.gt.f32.partialorder %v349, 0.0
  %vm382 = vcmp.gt.f32.partialorder %v350, 0.0
  %vm383 = vcmp.gt.f32.partialorder %v351, 0.0
  %vm384 = vcmp.gt.f32.partialorder %v352, 0.0
  %vm385 = vcmp.gt.f32.partialorder %v353, 0.0
  %vm386 = vcmp.gt.f32.partialorder %v354, 0.0
  %vm387 = vcmp.gt.f32.partialorder %v355, 0.0
  %vm388 = vcmp.gt.f32.partialorder %v356, 0.0
  %vm389 = vcmp.gt.f32.partialorder %v357, 0.0
  %vm390 = vcmp.gt.f32.partialorder %v358, 0.0
  %vm391 = vcmp.gt.f32.partialorder %v359, 0.0
  %vm392 = vcmp.gt.f32.partialorder %v360, 0.0
  %vm393 = vcmp.gt.f32.partialorder %v361, 0.0
  %vm394 = vcmp.gt.f32.partialorder %v362, 0.0
  %vm395 = vcmp.gt.f32.partialorder %v363, 0.0
  %vm396 = vcmp.gt.f32.partialorder %v364, 0.0
  %vm397 = vcmp.gt.f32.partialorder %v365, 0.0
  %vm398 = vcmp.gt.f32.partialorder %v366, 0.0
  %vm399 = vcmp.gt.f32.partialorder %v367, 0.0
  %vm400 = vcmp.gt.f32.partialorder %v368, 0.0
  %vm401 = vcmp.gt.f32.partialorder %v369, 0.0
  %vm402 = vcmp.gt.f32.partialorder %v370, 0.0
  %vm403 = vcmp.gt.f32.partialorder %v371, 0.0
  %vm404 = vcmp.gt.f32.partialorder %v372, 0.0
  %vm405 = vcmp.gt.f32.partialorder %v373, 0.0
  %vm406 = vcmp.gt.f32.partialorder %v374, 0.0
  %vm407 = vcmp.gt.f32.partialorder %v375, 0.0
  %v408 = vmin.f32 %v344, 0.0
  %v409 = vmin.f32 %v345, 0.0
  %v410 = vmin.f32 %v346, 0.0
  %v411 = vmin.f32 %v347, 0.0
  %v412 = vmin.f32 %v348, 0.0
  %v413 = vmin.f32 %v349, 0.0
  %v414 = vmin.f32 %v350, 0.0
  %v415 = vmin.f32 %v351, 0.0
  %v416 = vmin.f32 %v352, 0.0
  %v417 = vmin.f32 %v353, 0.0
  %v418 = vmin.f32 %v354, 0.0
  %v419 = vmin.f32 %v355, 0.0
  %v420 = vmin.f32 %v356, 0.0
  %v421 = vmin.f32 %v357, 0.0
  %v422 = vmin.f32 %v358, 0.0
  %v423 = vmin.f32 %v359, 0.0
  %v424 = vmin.f32 %v360, 0.0
  %v425 = vmin.f32 %v361, 0.0
  %v426 = vmin.f32 %v362, 0.0
  %v427 = vmin.f32 %v363, 0.0
  %v428 = vmin.f32 %v364, 0.0
  %v429 = vmin.f32 %v365, 0.0
  %v430 = vmin.f32 %v366, 0.0
  %v431 = vmin.f32 %v367, 0.0
  %v432 = vmin.f32 %v368, 0.0
  %v433 = vmin.f32 %v369, 0.0
  %v434 = vmin.f32 %v370, 0.0
  %v435 = vmin.f32 %v371, 0.0
  %v436 = vmin.f32 %v372, 0.0
  %v437 = vmin.f32 %v373, 0.0
  %v438 = vmin.f32 %v374, 0.0
  %v439 = vmin.f32 %v375, 0.0
  %v440 = vmul.f32 %v408, 1.442695
  %v441 = vpow.pop %v440
  %v442 = vmul.f32 %v409, 1.442695
  %v443 = vpow.pop %v442
  %v444 = vmul.f32 %v410, 1.442695
  %v445 = vpow.pop %v444
  %v446 = vmul.f32 %v411, 1.442695
  %v447 = vpow.pop %v446
  %v448 = vmul.f32 %v412, 1.442695
  %v449 = vpow.pop %v448
  %v450 = vmul.f32 %v413, 1.442695
  %v451 = vpow.pop %v450
  %v452 = vmul.f32 %v414, 1.442695
  %v453 = vpow.pop %v452
  %v454 = vmul.f32 %v415, 1.442695
  %v455 = vpow.pop %v454
  %v456 = vmul.f32 %v416, 1.442695
  %v457 = vpow.pop %v456
  %v458 = vmul.f32 %v417, 1.442695
  %v459 = vpow.pop %v458
  %v460 = vmul.f32 %v418, 1.442695
  %v461 = vpow.pop %v460
  %v462 = vmul.f32 %v419, 1.442695
  %v463 = vpow.pop %v462
  %v464 = vmul.f32 %v420, 1.442695
  %v465 = vpow.pop %v464
  %v466 = vmul.f32 %v421, 1.442695
  %v467 = vpow.pop %v466
  %v468 = vmul.f32 %v422, 1.442695
  %v469 = vpow.pop %v468
  %v470 = vmul.f32 %v423, 1.442695
  %v471 = vpow.pop %v470
  %v472 = vmul.f32 %v424, 1.442695
  %v473 = vpow.pop %v472
  %v474 = vmul.f32 %v425, 1.442695
  %v475 = vpow.pop %v474
  %v476 = vmul.f32 %v426, 1.442695
  %v477 = vpow.pop %v476
  %v478 = vmul.f32 %v427, 1.442695
  %v479 = vpow.pop %v478
  %v480 = vmul.f32 %v428, 1.442695
  %v481 = vpow.pop %v480
  %v482 = vmul.f32 %v429, 1.442695
  %v483 = vpow.pop %v482
  %v484 = vmul.f32 %v430, 1.442695
  %v485 = vpow.pop %v484
  %v486 = vmul.f32 %v431, 1.442695
  %v487 = vpow.pop %v486
  %v488 = vmul.f32 %v432, 1.442695
  %v489 = vpow.pop %v488
  %v490 = vmul.f32 %v433, 1.442695
  %v491 = vpow.pop %v490
  %v492 = vmul.f32 %v434, 1.442695
  %v493 = vpow.pop %v492
  %v494 = vmul.f32 %v435, 1.442695
  %v495 = vpow.pop %v494
  %v496 = vmul.f32 %v436, 1.442695
  %v497 = vpow.pop %v496
  %v498 = vmul.f32 %v437, 1.442695
  %v499 = vpow.pop %v498
  %v500 = vmul.f32 %v438, 1.442695
  %v501 = vpow.pop %v500
  %v502 = vmul.f32 %v439, 1.442695
  %v503 = vpow.pop %v502
  %v504 = vsub.f32 %v441, 1.0
  %v505 = vsub.f32 %v443, 1.0
  %v506 = vsub.f32 %v445, 1.0
  %v507 = vsub.f32 %v447, 1.0
  %v508 = vsub.f32 %v449, 1.0
  %v509 = vsub.f32 %v451, 1.0
  %v510 = vsub.f32 %v453, 1.0
  %v511 = vsub.f32 %v455, 1.0
  %v512 = vsub.f32 %v457, 1.0
  %v513 = vsub.f32 %v459, 1.0
  %v514 = vsub.f32 %v461, 1.0
  %v515 = vsub.f32 %v463, 1.0
  %v516 = vsub.f32 %v465, 1.0
  %v517 = vsub.f32 %v467, 1.0
  %v518 = vsub.f32 %v469, 1.0
  %v519 = vsub.f32 %v471, 1.0
  %v520 = vsub.f32 %v473, 1.0
  %v521 = vsub.f32 %v475, 1.0
  %v522 = vsub.f32 %v477, 1.0
  %v523 = vsub.f32 %v479, 1.0
  %v524 = vsub.f32 %v481, 1.0
  %v525 = vsub.f32 %v483, 1.0
  %v526 = vsub.f32 %v485, 1.0
  %v527 = vsub.f32 %v487, 1.0
  %v528 = vsub.f32 %v489, 1.0
  %v529 = vsub.f32 %v491, 1.0
  %v530 = vsub.f32 %v493, 1.0
  %v531 = vsub.f32 %v495, 1.0
  %v532 = vsub.f32 %v497, 1.0
  %v533 = vsub.f32 %v499, 1.0
  %v534 = vsub.f32 %v501, 1.0
  %v535 = vsub.f32 %v503, 1.0
  %v536 = vsel %vm376, %v344, %v504
  %v537 = vsel %vm377, %v345, %v505
  %v538 = vsel %vm378, %v346, %v506
  %v539 = vsel %vm379, %v347, %v507
  %v540 = vsel %vm380, %v348, %v508
  %v541 = vsel %vm381, %v349, %v509
  %v542 = vsel %vm382, %v350, %v510
  %v543 = vsel %vm383, %v351, %v511
  %v544 = vsel %vm384, %v352, %v512
  %v545 = vsel %vm385, %v353, %v513
  %v546 = vsel %vm386, %v354, %v514
  %v547 = vsel %vm387, %v355, %v515
  %v548 = vsel %vm388, %v356, %v516
  %v549 = vsel %vm389, %v357, %v517
  %v550 = vsel %vm390, %v358, %v518
  %v551 = vsel %vm391, %v359, %v519
  %v552 = vsel %vm392, %v360, %v520
  %v553 = vsel %vm393, %v361, %v521
  %v554 = vsel %vm394, %v362, %v522
  %v555 = vsel %vm395, %v363, %v523
  %v556 = vsel %vm396, %v364, %v524
  %v557 = vsel %vm397, %v365, %v525
  %v558 = vsel %vm398, %v366, %v526
  %v559 = vsel %vm399, %v367, %v527
  %v560 = vsel %vm400, %v368, %v528
  %v561 = vsel %vm401, %v369, %v529
  %v562 = vsel %vm402, %v370, %v530
  %v563 = vsel %vm403, %v371, %v531
  %v564 = vsel %vm404, %v372, %v532
  %v565 = vsel %vm405, %v373, %v533
  %v566 = vsel %vm406, %v374, %v534
  %v567 = vsel %vm407, %v375, %v535
  %v568 = vmul.f32 %v55, %v304
  %v569 = vmul.f32 %v56, %v304
  %v570 = vmul.f32 %v57, %v304
  %v571 = vmul.f32 %v58, %v304
  %v572 = vmul.f32 %v59, %v304
  %v573 = vmul.f32 %v60, %v304
  %v574 = vmul.f32 %v61, %v304
  %v575 = vmul.f32 %v62, %v304
  %v576 = vmul.f32 %v63, %v304
  %v577 = vmul.f32 %v64, %v304
  %v578 = vmul.f32 %v65, %v304
  %v579 = vmul.f32 %v66, %v304
  %v580 = vmul.f32 %v67, %v304
  %v581 = vmul.f32 %v68, %v304
  %v582 = vmul.f32 %v69, %v304
  %v583 = vmul.f32 %v70, %v304
  %v584 = vmul.f32 %v71, %v304
  %v585 = vmul.f32 %v72, %v304
  %v586 = vmul.f32 %v73, %v304
  %v587 = vmul.f32 %v74, %v304
  %v588 = vmul.f32 %v75, %v304
  %v589 = vmul.f32 %v76, %v304
  %v590 = vmul.f32 %v77, %v304
  %v591 = vmul.f32 %v78, %v304
  %v592 = vmul.f32 %v79, %v304
  %v593 = vmul.f32 %v80, %v304
  %v594 = vmul.f32 %v81, %v304
  %v595 = vmul.f32 %v82, %v304
  %v596 = vmul.f32 %v83, %v304
  %v597 = vmul.f32 %v84, %v304
  %v598 = vmul.f32 %v85, %v304
  %v599 = vmul.f32 %v86, %v304
  %v600 = vadd.f32 %v568, %v342
  %v601 = vadd.f32 %v569, %v342
  %v602 = vadd.f32 %v570, %v342
  %v603 = vadd.f32 %v571, %v342
  %v604 = vadd.f32 %v572, %v342
  %v605 = vadd.f32 %v573, %v342
  %v606 = vadd.f32 %v574, %v342
  %v607 = vadd.f32 %v575, %v342
  %v608 = vadd.f32 %v576, %v342
  %v609 = vadd.f32 %v577, %v342
  %v610 = vadd.f32 %v578, %v342
  %v611 = vadd.f32 %v579, %v342
  %v612 = vadd.f32 %v580, %v342
  %v613 = vadd.f32 %v581, %v342
  %v614 = vadd.f32 %v582, %v342
  %v615 = vadd.f32 %v583, %v342
  %v616 = vadd.f32 %v584, %v342
  %v617 = vadd.f32 %v585, %v342
  %v618 = vadd.f32 %v586, %v342
  %v619 = vadd.f32 %v587, %v342
  %v620 = vadd.f32 %v588, %v342
  %v621 = vadd.f32 %v589, %v342
  %v622 = vadd.f32 %v590, %v342
  %v623 = vadd.f32 %v591, %v342
  %v624 = vadd.f32 %v592, %v342
  %v625 = vadd.f32 %v593, %v342
  %v626 = vadd.f32 %v594, %v342
  %v627 = vadd.f32 %v595, %v342
  %v628 = vadd.f32 %v596, %v342
  %v629 = vadd.f32 %v597, %v342
  %v630 = vadd.f32 %v598, %v342
  %v631 = vadd.f32 %v599, %v342
  %vm632 = vcmp.gt.f32.partialorder %v600, 0.0
  %vm633 = vcmp.gt.f32.partialorder %v601, 0.0
  %vm634 = vcmp.gt.f32.partialorder %v602, 0.0
  %vm635 = vcmp.gt.f32.partialorder %v603, 0.0
  %vm636 = vcmp.gt.f32.partialorder %v604, 0.0
  %vm637 = vcmp.gt.f32.partialorder %v605, 0.0
  %vm638 = vcmp.gt.f32.partialorder %v606, 0.0
  %vm639 = vcmp.gt.f32.partialorder %v607, 0.0
  %vm640 = vcmp.gt.f32.partialorder %v608, 0.0
  %vm641 = vcmp.gt.f32.partialorder %v609, 0.0
  %vm642 = vcmp.gt.f32.partialorder %v610, 0.0
  %vm643 = vcmp.gt.f32.partialorder %v611, 0.0
  %vm644 = vcmp.gt.f32.partialorder %v612, 0.0
  %vm645 = vcmp.gt.f32.partialorder %v613, 0.0
  %vm646 = vcmp.gt.f32.partialorder %v614, 0.0
  %vm647 = vcmp.gt.f32.partialorder %v615, 0.0
  %vm648 = vcmp.gt.f32.partialorder %v616, 0.0
  %vm649 = vcmp.gt.f32.partialorder %v617, 0.0
  %vm650 = vcmp.gt.f32.partialorder %v618, 0.0
  %vm651 = vcmp.gt.f32.partialorder %v619, 0.0
  %vm652 = vcmp.gt.f32.partialorder %v620, 0.0
  %vm653 = vcmp.gt.f32.partialorder %v621, 0.0
  %vm654 = vcmp.gt.f32.partialorder %v622, 0.0
  %vm655 = vcmp.gt.f32.partialorder %v623, 0.0
  %vm656 = vcmp.gt.f32.partialorder %v624, 0.0
  %vm657 = vcmp.gt.f32.partialorder %v625, 0.0
  %vm658 = vcmp.gt.f32.partialorder %v626, 0.0
  %vm659 = vcmp.gt.f32.partialorder %v627, 0.0
  %vm660 = vcmp.gt.f32.partialorder %v628, 0.0
  %vm661 = vcmp.gt.f32.partialorder %v629, 0.0
  %vm662 = vcmp.gt.f32.partialorder %v630, 0.0
  %vm663 = vcmp.gt.f32.partialorder %v631, 0.0
  %v664 = vmin.f32 %v600, 0.0
  %v665 = vmin.f32 %v601, 0.0
  %v666 = vmin.f32 %v602, 0.0
  %v667 = vmin.f32 %v603, 0.0
  %v668 = vmin.f32 %v604, 0.0
  %v669 = vmin.f32 %v605, 0.0
  %v670 = vmin.f32 %v606, 0.0
  %v671 = vmin.f32 %v607, 0.0
  %v672 = vmin.f32 %v608, 0.0
  %v673 = vmin.f32 %v609, 0.0
  %v674 = vmin.f32 %v610, 0.0
  %v675 = vmin.f32 %v611, 0.0
  %v676 = vmin.f32 %v612, 0.0
  %v677 = vmin.f32 %v613, 0.0
  %v678 = vmin.f32 %v614, 0.0
  %v679 = vmin.f32 %v615, 0.0
  %v680 = vmin.f32 %v616, 0.0
  %v681 = vmin.f32 %v617, 0.0
  %v682 = vmin.f32 %v618, 0.0
  %v683 = vmin.f32 %v619, 0.0
  %v684 = vmin.f32 %v620, 0.0
  %v685 = vmin.f32 %v621, 0.0
  %v686 = vmin.f32 %v622, 0.0
  %v687 = vmin.f32 %v623, 0.0
  %v688 = vmin.f32 %v624, 0.0
  %v689 = vmin.f32 %v625, 0.0
  %v690 = vmin.f32 %v626, 0.0
  %v691 = vmin.f32 %v627, 0.0
  %v692 = vmin.f32 %v628, 0.0
  %v693 = vmin.f32 %v629, 0.0
  %v694 = vmin.f32 %v630, 0.0
  %v695 = vmin.f32 %v631, 0.0
  %v696 = vmul.f32 %v664, 1.442695
  %v697 = vpow.pop %v696
  %v698 = vmul.f32 %v665, 1.442695
  %v699 = vpow.pop %v698
  %v700 = vmul.f32 %v666, 1.442695
  %v701 = vpow.pop %v700
  %v702 = vmul.f32 %v667, 1.442695
  %v703 = vpow.pop %v702
  %v704 = vmul.f32 %v668, 1.442695
  %v705 = vpow.pop %v704
  %v706 = vmul.f32 %v669, 1.442695
  %v707 = vpow.pop %v706
  %v708 = vmul.f32 %v670, 1.442695
  %v709 = vpow.pop %v708
  %v710 = vmul.f32 %v671, 1.442695
  %v711 = vpow.pop %v710
  %v712 = vmul.f32 %v672, 1.442695
  %v713 = vpow.pop %v712
  %v714 = vmul.f32 %v673, 1.442695
  %v715 = vpow.pop %v714
  %v716 = vmul.f32 %v674, 1.442695
  %v717 = vpow.pop %v716
  %v718 = vmul.f32 %v675, 1.442695
  %v719 = vpow.pop %v718
  %v720 = vmul.f32 %v676, 1.442695
  %v721 = vpow.pop %v720
  %v722 = vmul.f32 %v677, 1.442695
  %v723 = vpow.pop %v722
  %v724 = vmul.f32 %v678, 1.442695
  %v725 = vpow.pop %v724
  %v726 = vmul.f32 %v679, 1.442695
  %v727 = vpow.pop %v726
  %v728 = vmul.f32 %v680, 1.442695
  %v729 = vpow.pop %v728
  %v730 = vmul.f32 %v681, 1.442695
  %v731 = vpow.pop %v730
  %v732 = vmul.f32 %v682, 1.442695
  %v733 = vpow.pop %v732
  %v734 = vmul.f32 %v683, 1.442695
  %v735 = vpow.pop %v734
  %v736 = vmul.f32 %v684, 1.442695
  %v737 = vpow.pop %v736
  %v738 = vmul.f32 %v685, 1.442695
  %v739 = vpow.pop %v738
  %v740 = vmul.f32 %v686, 1.442695
  %v741 = vpow.pop %v740
  %v742 = vmul.f32 %v687, 1.442695
  %v743 = vpow.pop %v742
  %v744 = vmul.f32 %v688, 1.442695
  %v745 = vpow.pop %v744
  %v746 = vmul.f32 %v689, 1.442695
  %v747 = vpow.pop %v746
  %v748 = vmul.f32 %v690, 1.442695
  %v749 = vpow.pop %v748
  %v750 = vmul.f32 %v691, 1.442695
  %v751 = vpow.pop %v750
  %v752 = vmul.f32 %v692, 1.442695
  %v753 = vpow.pop %v752
  %v754 = vmul.f32 %v693, 1.442695
  %v755 = vpow.pop %v754
  %v756 = vmul.f32 %v694, 1.442695
  %v757 = vpow.pop %v756
  %v758 = vmul.f32 %v695, 1.442695
  %v759 = vpow.pop %v758
  %v760 = vsub.f32 %v697, 1.0
  %v761 = vsub.f32 %v699, 1.0
  %v762 = vsub.f32 %v701, 1.0
  %v763 = vsub.f32 %v703, 1.0
  %v764 = vsub.f32 %v705, 1.0
  %v765 = vsub.f32 %v707, 1.0
  %v766 = vsub.f32 %v709, 1.0
  %v767 = vsub.f32 %v711, 1.0
  %v768 = vsub.f32 %v713, 1.0
  %v769 = vsub.f32 %v715, 1.0
  %v770 = vsub.f32 %v717, 1.0
  %v771 = vsub.f32 %v719, 1.0
  %v772 = vsub.f32 %v721, 1.0
  %v773 = vsub.f32 %v723, 1.0
  %v774 = vsub.f32 %v725, 1.0
  %v775 = vsub.f32 %v727, 1.0
  %v776 = vsub.f32 %v729, 1.0
  %v777 = vsub.f32 %v731, 1.0
  %v778 = vsub.f32 %v733, 1.0
  %v779 = vsub.f32 %v735, 1.0
  %v780 = vsub.f32 %v737, 1.0
  %v781 = vsub.f32 %v739, 1.0
  %v782 = vsub.f32 %v741, 1.0
  %v783 = vsub.f32 %v743, 1.0
  %v784 = vsub.f32 %v745, 1.0
  %v785 = vsub.f32 %v747, 1.0
  %v786 = vsub.f32 %v749, 1.0
  %v787 = vsub.f32 %v751, 1.0
  %v788 = vsub.f32 %v753, 1.0
  %v789 = vsub.f32 %v755, 1.0
  %v790 = vsub.f32 %v757, 1.0
  %v791 = vsub.f32 %v759, 1.0
  %v792 = vsel %vm632, %v600, %v760
  %v793 = vsel %vm633, %v601, %v761
  %v794 = vsel %vm634, %v602, %v762
  %v795 = vsel %vm635, %v603, %v763
  %v796 = vsel %vm636, %v604, %v764
  %v797 = vsel %vm637, %v605, %v765
  %v798 = vsel %vm638, %v606, %v766
  %v799 = vsel %vm639, %v607, %v767
  %v800 = vsel %vm640, %v608, %v768
  %v801 = vsel %vm641, %v609, %v769
  %v802 = vsel %vm642, %v610, %v770
  %v803 = vsel %vm643, %v611, %v771
  %v804 = vsel %vm644, %v612, %v772
  %v805 = vsel %vm645, %v613, %v773
  %v806 = vsel %vm646, %v614, %v774
  %v807 = vsel %vm647, %v615, %v775
  %v808 = vsel %vm648, %v616, %v776
  %v809 = vsel %vm649, %v617, %v777
  %v810 = vsel %vm650, %v618, %v778
  %v811 = vsel %vm651, %v619, %v779
  %v812 = vsel %vm652, %v620, %v780
  %v813 = vsel %vm653, %v621, %v781
  %v814 = vsel %vm654, %v622, %v782
  %v815 = vsel %vm655, %v623, %v783
  %v816 = vsel %vm656, %v624, %v784
  %v817 = vsel %vm657, %v625, %v785
  %v818 = vsel %vm658, %v626, %v786
  %v819 = vsel %vm659, %v627, %v787
  %v820 = vsel %vm660, %v628, %v788
  %v821 = vsel %vm661, %v629, %v789
  %v822 = vsel %vm662, %v630, %v790
  %v823 = vsel %vm663, %v631, %v791
  %v824 = vadd.f32 %v536, %v792
  %v825 = vadd.f32 %v537, %v793
  %v826 = vadd.f32 %v538, %v794
  %v827 = vadd.f32 %v539, %v795
  %v828 = vadd.f32 %v540, %v796
  %v829 = vadd.f32 %v541, %v797
  %v830 = vadd.f32 %v542, %v798
  %v831 = vadd.f32 %v543, %v799
  %v832 = vadd.f32 %v544, %v800
  %v833 = vadd.f32 %v545, %v801
  %v834 = vadd.f32 %v546, %v802
  %v835 = vadd.f32 %v547, %v803
  %v836 = vadd.f32 %v548, %v804
  %v837 = vadd.f32 %v549, %v805
  %v838 = vadd.f32 %v550, %v806
  %v839 = vadd.f32 %v551, %v807
  %v840 = vadd.f32 %v552, %v808
  %v841 = vadd.f32 %v553, %v809
  %v842 = vadd.f32 %v554, %v810
  %v843 = vadd.f32 %v555, %v811
  %v844 = vadd.f32 %v556, %v812
  %v845 = vadd.f32 %v557, %v813
  %v846 = vadd.f32 %v558, %v814
  %v847 = vadd.f32 %v559, %v815
  %v848 = vadd.f32 %v560, %v816
  %v849 = vadd.f32 %v561, %v817
  %v850 = vadd.f32 %v562, %v818
  %v851 = vadd.f32 %v563, %v819
  %v852 = vadd.f32 %v564, %v820
  %v853 = vadd.f32 %v565, %v821
  %v854 = vadd.f32 %v566, %v822
  %v855 = vadd.f32 %v567, %v823
  %v856 = vmul.f32 %v824, 0.5
  %v857 = vmul.f32 %v825, 0.5
  %v858 = vmul.f32 %v826, 0.5
  %v859 = vmul.f32 %v827, 0.5
  %v860 = vmul.f32 %v828, 0.5
  %v861 = vmul.f32 %v829, 0.5
  %v862 = vmul.f32 %v830, 0.5
  %v863 = vmul.f32 %v831, 0.5
  %v864 = vmul.f32 %v832, 0.5
  %v865 = vmul.f32 %v833, 0.5
  %v866 = vmul.f32 %v834, 0.5
  %v867 = vmul.f32 %v835, 0.5
  %v868 = vmul.f32 %v836, 0.5
  %v869 = vmul.f32 %v837, 0.5
  %v870 = vmul.f32 %v838, 0.5
  %v871 = vmul.f32 %v839, 0.5
  %v872 = vmul.f32 %v840, 0.5
  %v873 = vmul.f32 %v841, 0.5
  %v874 = vmul.f32 %v842, 0.5
  %v875 = vmul.f32 %v843, 0.5
  %v876 = vmul.f32 %v844, 0.5
  %v877 = vmul.f32 %v845, 0.5
  %v878 = vmul.f32 %v846, 0.5
  %v879 = vmul.f32 %v847, 0.5
  %v880 = vmul.f32 %v848, 0.5
  %v881 = vmul.f32 %v849, 0.5
  %v882 = vmul.f32 %v850, 0.5
  %v883 = vmul.f32 %v851, 0.5
  %v884 = vmul.f32 %v852, 0.5
  %v885 = vmul.f32 %v853, 0.5
  %v886 = vmul.f32 %v854, 0.5
  %v887 = vmul.f32 %v855, 0.5
  %v888 = vld [vmem:[%s4] sm:$0xff]
  %v889 = vld [vmem:[%s4 + $0x8] sm:$0xff]
  %v890 = vld [vmem:[%s4 + $0x10] sm:$0xff]
  %v891 = vld [vmem:[%s4 + $0x18] sm:$0xff]
  %v892 = vld [vmem:[%s4 + $0x20] sm:$0xff]
  %v893 = vld [vmem:[%s4 + $0x28] sm:$0xff]
  %v894 = vld [vmem:[%s4 + $0x30] sm:$0xff]
  %v895 = vld [vmem:[%s4 + $0x38] sm:$0xff]
  %v896 = vld [vmem:[%s4 + $0x40] sm:$0xff]
  %v897 = vld [vmem:[%s4 + $0x48] sm:$0xff]
  %v898 = vld [vmem:[%s4 + $0x50] sm:$0xff]
  %v899 = vld [vmem:[%s4 + $0x58] sm:$0xff]
  %v900 = vld [vmem:[%s4 + $0x60] sm:$0xff]
  %v901 = vld [vmem:[%s4 + $0x68] sm:$0xff]
  %v902 = vld [vmem:[%s4 + $0x70] sm:$0xff]
  %v903 = vld [vmem:[%s4 + $0x78] sm:$0xff]
  %v904 = vld [vmem:[%s4 + $0x80] sm:$0xff]
  %v905 = vld [vmem:[%s4 + $0x88] sm:$0xff]
  %v906 = vld [vmem:[%s4 + $0x90] sm:$0xff]
  %v907 = vld [vmem:[%s4 + $0x98] sm:$0xff]
  %v908 = vld [vmem:[%s4 + $0xa0] sm:$0xff]
  %v909 = vld [vmem:[%s4 + $0xa8] sm:$0xff]
  %v910 = vld [vmem:[%s4 + $0xb0] sm:$0xff]
  %v911 = vld [vmem:[%s4 + $0xb8] sm:$0xff]
  %v912 = vld [vmem:[%s5] sm:$0xf]
  %v914 = vlaneseq
  %v915 = vshrl.u32 %v914, 7
  %v916 = vsub.s32 0, %v915
  %v917 = vrot.slane %v912, %v916
  %v918 = vlaneseq
  %v919 = vshrl.u32 %v918, 7
  %v920 = vsub.s32 1, %v919
  %v921 = vrot.slane %v912, %v920
  %v922 = vlaneseq
  %v923 = vshrl.u32 %v922, 7
  %v924 = vsub.s32 2, %v923
  %v925 = vrot.slane %v912, %v924
  %v926 = vlaneseq
  %v927 = vshrl.u32 %v926, 7
  %v928 = vsub.s32 3, %v927
  %v929 = vrot.slane %v912, %v928
  %v935 = vsel %vm87, %v856, 0
  %v938 = vsel %vm87, %v857, 0
  %v941 = vsel %vm87, %v858, 0
  %v944 = vsel %vm87, %v859, 0
  %v947 = vsel %vm87, %v860, 0
  %v950 = vsel %vm87, %v861, 0
  %v953 = vsel %vm87, %v862, 0
  %v956 = vsel %vm87, %v863, 0
  %v959 = vsel %vm87, %v864, 0
  %v962 = vsel %vm87, %v865, 0
  %v965 = vsel %vm87, %v866, 0
  %v968 = vsel %vm87, %v867, 0
  %v971 = vsel %vm87, %v868, 0
  %v974 = vsel %vm87, %v869, 0
  %v977 = vsel %vm87, %v870, 0
  %v980 = vsel %vm87, %v871, 0
  %v983 = vsel %vm87, %v872, 0
  %v986 = vsel %vm87, %v873, 0
  %v989 = vsel %vm87, %v874, 0
  %v992 = vsel %vm87, %v875, 0
  %v995 = vsel %vm87, %v876, 0
  %v998 = vsel %vm87, %v877, 0
  %v1001 = vsel %vm87, %v878, 0
  %v1004 = vsel %vm87, %v879, 0
  %v1007 = vsel %vm87, %v880, 0
  %v1010 = vsel %vm87, %v881, 0
  %v1013 = vsel %vm87, %v882, 0
  %v1016 = vsel %vm87, %v883, 0
  %v1019 = vsel %vm87, %v884, 0
  %v1022 = vsel %vm87, %v885, 0
  %v1025 = vsel %vm87, %v886, 0
  %v1028 = vsel %vm87, %v887, 0
  %1030 = vmatprep.subr.mxu0 %v889
  %1031 = vmatpush1.msra.mxu0 %v888
  %1032 = vmatprep.subr.mxu0 %v893
  %1033 = vmatpush1.msra.mxu0 %v892
  %1034 = vmatprep.subr.mxu0 %v897
  %1035 = vmatpush1.msra.mxu0 %v896
  %1036 = vmatprep.subr.mxu0 %v901
  %1037 = vmatpush1.msra.mxu0 %v900
  %1038 = vmatprep.subr.mxu0 %v905
  %1039 = vmatpush1.msra.mxu0 %v904
  %1040 = vmatprep.subr.mxu0 %v909
  %1041 = vmatpush1.msra.mxu0 %v908
  %1042 = vmatprep.subr.mxu0 0.0
  %1043 = vmatpush1.msra.mxu0 0.0
  %1044 = vmatprep.subr.mxu0 0.0
  %1045 = vmatpush1.msra.mxu0 0.0
  %1046 = vmatprep.subr.mxu0 0.0
  %1047 = vmatpush1.msra.mxu0 0.0
  %1048 = vmatprep.subr.mxu0 0.0
  %1049 = vmatpush1.msra.mxu0 0.0
  %1050 = vmatprep.subr.mxu0 0.0
  %1051 = vmatpush1.msra.mxu0 0.0
  %1052 = vmatprep.subr.mxu0 0.0
  %1053 = vmatpush1.msra.mxu0 0.0
  %1054 = vmatprep.subr.mxu0 0.0
  %1055 = vmatpush1.msra.mxu0 0.0
  %1056 = vmatprep.subr.mxu0 0.0
  %1057 = vmatpush1.msra.mxu0 0.0
  %1058 = vmatprep.subr.mxu0 0.0
  %1059 = vmatpush1.msra.mxu0 0.0
  %1060 = vmatprep.subr.mxu0 0.0
  %1061 = vmatpush1.msra.mxu0 0.0
  %1062 = vmatprep.subr.mxu0 0.0
  %1063 = vmatpush1.msra.mxu0 0.0
  %1064 = vmatprep.subr.mxu0 0.0
  %1065 = vmatpush1.msra.mxu0 0.0
  %1066 = vmatprep.subr.mxu0 0.0
  %1067 = vmatpush1.msra.mxu0 0.0
  %1068 = vmatprep.subr.mxu0 0.0
  %1069 = vmatpush1.msra.mxu0 0.0
  %1070 = vmatprep.subr.mxu0 0.0
  %1071 = vmatpush1.msra.mxu0 0.0
  %1072 = vmatprep.subr.mxu0 0.0
  %1073 = vmatpush1.msra.mxu0 0.0
  %1074 = vmatprep.subr.mxu0 0.0
  %1075 = vmatpush1.msra.mxu0 0.0
  %1076 = vmatprep.subr.mxu0 0.0
  %1077 = vmatpush1.msra.mxu0 0.0
  %1078 = vmatprep.subr.mxu0 0.0
  %1079 = vmatpush1.msra.mxu0 0.0
  %1080 = vmatprep.subr.mxu0 0.0
  %1081 = vmatpush1.msra.mxu0 0.0
  %1082 = vmatprep.subr.mxu0 0.0
  %1083 = vmatpush1.msra.mxu0 0.0
  %1084 = vmatprep.subr.mxu0 0.0
  %1085 = vmatpush1.msra.mxu0 0.0
  %1086 = vmatprep.subr.mxu0 0.0
  %1087 = vmatpush1.msra.mxu0 0.0
  %1088 = vmatprep.subr.mxu0 0.0
  %1089 = vmatpush1.msra.mxu0 0.0
  %1090 = vmatprep.subr.mxu0 0.0
  %1091 = vmatpush1.msra.mxu0 0.0
  %1092 = vmatprep.subr.mxu0 0.0
  %1093 = vmatpush1.msra.mxu0 0.0
  %1094 = vmatprep.mubr.f32.mxu0 0.0
  %1095 = vmatmul.mubr.f32.gmra.mrb[0].mxu0 %v935
  %v1096 = vpop.f32.mrb[0].mxu0
  %v1097 = vadd.f32 %v917, %v1096
  %v1098 = vpop.f32.mrb[0].mxu0
  %v1099 = vadd.f32 %v921, %v1098
  %1100 = vmatprep.mubr.f32.mxu0 0.0
  %1101 = vmatmul.mubr.f32.gmra.mrb[0].mxu0 %v938
  %v1102 = vpop.f32.mrb[0].mxu0
  %v1103 = vadd.f32 %v917, %v1102
  %v1104 = vpop.f32.mrb[0].mxu0
  %v1105 = vadd.f32 %v921, %v1104
  %1106 = vmatprep.mubr.f32.mxu0 0.0
  %1107 = vmatmul.mubr.f32.gmra.mrb[0].mxu0 %v941
  %v1108 = vpop.f32.mrb[0].mxu0
  %v1109 = vadd.f32 %v917, %v1108
  %v1110 = vpop.f32.mrb[0].mxu0
  %v1111 = vadd.f32 %v921, %v1110
  %1112 = vmatprep.mubr.f32.mxu0 0.0
  %1113 = vmatmul.mubr.f32.gmra.mrb[0].mxu0 %v944
  %v1114 = vpop.f32.mrb[0].mxu0
  %v1115 = vadd.f32 %v917, %v1114
  %v1116 = vpop.f32.mrb[0].mxu0
  %v1117 = vadd.f32 %v921, %v1116
  %1118 = vmatprep.mubr.f32.mxu0 0.0
  %1119 = vmatmul.mubr.f32.gmra.mrb[0].mxu0 %v947
  %v1120 = vpop.f32.mrb[0].mxu0
  %v1121 = vadd.f32 %v917, %v1120
  %v1122 = vpop.f32.mrb[0].mxu0
  %v1123 = vadd.f32 %v921, %v1122
  %1124 = vmatprep.mubr.f32.mxu0 0.0
  %1125 = vmatmul.mubr.f32.gmra.mrb[0].mxu0 %v950
  %v1126 = vpop.f32.mrb[0].mxu0
  %v1127 = vadd.f32 %v917, %v1126
  %v1128 = vpop.f32.mrb[0].mxu0
  %v1129 = vadd.f32 %v921, %v1128
  %1130 = vmatprep.mubr.f32.mxu0 0.0
  %1131 = vmatmul.mubr.f32.gmra.mrb[0].mxu0 %v953
  %v1132 = vpop.f32.mrb[0].mxu0
  %v1133 = vadd.f32 %v917, %v1132
  %v1134 = vpop.f32.mrb[0].mxu0
  %v1135 = vadd.f32 %v921, %v1134
  %1136 = vmatprep.mubr.f32.mxu0 0.0
  %1137 = vmatmul.mubr.f32.gmra.mrb[0].mxu0 %v956
  %v1138 = vpop.f32.mrb[0].mxu0
  %v1139 = vadd.f32 %v917, %v1138
  %v1140 = vpop.f32.mrb[0].mxu0
  %v1141 = vadd.f32 %v921, %v1140
  %1142 = vmatprep.mubr.f32.mxu0 0.0
  %1143 = vmatmul.mubr.f32.gmra.mrb[0].mxu0 %v959
  %v1144 = vpop.f32.mrb[0].mxu0
  %v1145 = vadd.f32 %v917, %v1144
  %v1146 = vpop.f32.mrb[0].mxu0
  %v1147 = vadd.f32 %v921, %v1146
  %1148 = vmatprep.mubr.f32.mxu0 0.0
  %1149 = vmatmul.mubr.f32.gmra.mrb[0].mxu0 %v962
  %v1150 = vpop.f32.mrb[0].mxu0
  %v1151 = vadd.f32 %v917, %v1150
  %v1152 = vpop.f32.mrb[0].mxu0
  %v1153 = vadd.f32 %v921, %v1152
  %1154 = vmatprep.mubr.f32.mxu0 0.0
  %1155 = vmatmul.mubr.f32.gmra.mrb[0].mxu0 %v965
  %v1156 = vpop.f32.mrb[0].mxu0
  %v1157 = vadd.f32 %v917, %v1156
  %v1158 = vpop.f32.mrb[0].mxu0
  %v1159 = vadd.f32 %v921, %v1158
  %1160 = vmatprep.mubr.f32.mxu0 0.0
  %1161 = vmatmul.mubr.f32.gmra.mrb[0].mxu0 %v968
  %v1162 = vpop.f32.mrb[0].mxu0
  %v1163 = vadd.f32 %v917, %v1162
  %v1164 = vpop.f32.mrb[0].mxu0
  %v1165 = vadd.f32 %v921, %v1164
  %1166 = vmatprep.mubr.f32.mxu0 0.0
  %1167 = vmatmul.mubr.f32.gmra.mrb[0].mxu0 %v971
  %v1168 = vpop.f32.mrb[0].mxu0
  %v1169 = vadd.f32 %v917, %v1168
  %v1170 = vpop.f32.mrb[0].mxu0
  %v1171 = vadd.f32 %v921, %v1170
  %1172 = vmatprep.mubr.f32.mxu0 0.0
  %1173 = vmatmul.mubr.f32.gmra.mrb[0].mxu0 %v974
  %v1174 = vpop.f32.mrb[0].mxu0
  %v1175 = vadd.f32 %v917, %v1174
  %v1176 = vpop.f32.mrb[0].mxu0
  %v1177 = vadd.f32 %v921, %v1176
  %1178 = vmatprep.mubr.f32.mxu0 0.0
  %1179 = vmatmul.mubr.f32.gmra.mrb[0].mxu0 %v977
  %v1180 = vpop.f32.mrb[0].mxu0
  %v1181 = vadd.f32 %v917, %v1180
  %v1182 = vpop.f32.mrb[0].mxu0
  %v1183 = vadd.f32 %v921, %v1182
  %1184 = vmatprep.mubr.f32.mxu0 0.0
  %1185 = vmatmul.mubr.f32.gmra.mrb[0].mxu0 %v980
  %v1186 = vpop.f32.mrb[0].mxu0
  %v1187 = vadd.f32 %v917, %v1186
  %v1188 = vpop.f32.mrb[0].mxu0
  %v1189 = vadd.f32 %v921, %v1188
  %1190 = vmatprep.mubr.f32.mxu0 0.0
  %1191 = vmatmul.mubr.f32.gmra.mrb[0].mxu0 %v983
  %v1192 = vpop.f32.mrb[0].mxu0
  %v1193 = vadd.f32 %v917, %v1192
  %v1194 = vpop.f32.mrb[0].mxu0
  %v1195 = vadd.f32 %v921, %v1194
  %1196 = vmatprep.mubr.f32.mxu0 0.0
  %1197 = vmatmul.mubr.f32.gmra.mrb[0].mxu0 %v986
  %v1198 = vpop.f32.mrb[0].mxu0
  %v1199 = vadd.f32 %v917, %v1198
  %v1200 = vpop.f32.mrb[0].mxu0
  %v1201 = vadd.f32 %v921, %v1200
  %1202 = vmatprep.mubr.f32.mxu0 0.0
  %1203 = vmatmul.mubr.f32.gmra.mrb[0].mxu0 %v989
  %v1204 = vpop.f32.mrb[0].mxu0
  %v1205 = vadd.f32 %v917, %v1204
  %v1206 = vpop.f32.mrb[0].mxu0
  %v1207 = vadd.f32 %v921, %v1206
  %1208 = vmatprep.mubr.f32.mxu0 0.0
  %1209 = vmatmul.mubr.f32.gmra.mrb[0].mxu0 %v992
  %v1210 = vpop.f32.mrb[0].mxu0
  %v1211 = vadd.f32 %v917, %v1210
  %v1212 = vpop.f32.mrb[0].mxu0
  %v1213 = vadd.f32 %v921, %v1212
  %1214 = vmatprep.mubr.f32.mxu0 0.0
  %1215 = vmatmul.mubr.f32.gmra.mrb[0].mxu0 %v995
  %v1216 = vpop.f32.mrb[0].mxu0
  %v1217 = vadd.f32 %v917, %v1216
  %v1218 = vpop.f32.mrb[0].mxu0
  %v1219 = vadd.f32 %v921, %v1218
  %1220 = vmatprep.mubr.f32.mxu0 0.0
  %1221 = vmatmul.mubr.f32.gmra.mrb[0].mxu0 %v998
  %v1222 = vpop.f32.mrb[0].mxu0
  %v1223 = vadd.f32 %v917, %v1222
  %v1224 = vpop.f32.mrb[0].mxu0
  %v1225 = vadd.f32 %v921, %v1224
  %1226 = vmatprep.mubr.f32.mxu0 0.0
  %1227 = vmatmul.mubr.f32.gmra.mrb[0].mxu0 %v1001
  %v1228 = vpop.f32.mrb[0].mxu0
  %v1229 = vadd.f32 %v917, %v1228
  %v1230 = vpop.f32.mrb[0].mxu0
  %v1231 = vadd.f32 %v921, %v1230
  %1232 = vmatprep.mubr.f32.mxu0 0.0
  %1233 = vmatmul.mubr.f32.gmra.mrb[0].mxu0 %v1004
  %v1234 = vpop.f32.mrb[0].mxu0
  %v1235 = vadd.f32 %v917, %v1234
  %v1236 = vpop.f32.mrb[0].mxu0
  %v1237 = vadd.f32 %v921, %v1236
  %1238 = vmatprep.mubr.f32.mxu0 0.0
  %1239 = vmatmul.mubr.f32.gmra.mrb[0].mxu0 %v1007
  %v1240 = vpop.f32.mrb[0].mxu0
  %v1241 = vadd.f32 %v917, %v1240
  %v1242 = vpop.f32.mrb[0].mxu0
  %v1243 = vadd.f32 %v921, %v1242
  %1244 = vmatprep.mubr.f32.mxu0 0.0
  %1245 = vmatmul.mubr.f32.gmra.mrb[0].mxu0 %v1010
  %v1246 = vpop.f32.mrb[0].mxu0
  %v1247 = vadd.f32 %v917, %v1246
  %v1248 = vpop.f32.mrb[0].mxu0
  %v1249 = vadd.f32 %v921, %v1248
  %1250 = vmatprep.mubr.f32.mxu0 0.0
  %1251 = vmatmul.mubr.f32.gmra.mrb[0].mxu0 %v1013
  %v1252 = vpop.f32.mrb[0].mxu0
  %v1253 = vadd.f32 %v917, %v1252
  %v1254 = vpop.f32.mrb[0].mxu0
  %v1255 = vadd.f32 %v921, %v1254
  %1256 = vmatprep.mubr.f32.mxu0 0.0
  %1257 = vmatmul.mubr.f32.gmra.mrb[0].mxu0 %v1016
  %v1258 = vpop.f32.mrb[0].mxu0
  %v1259 = vadd.f32 %v917, %v1258
  %v1260 = vpop.f32.mrb[0].mxu0
  %v1261 = vadd.f32 %v921, %v1260
  %1262 = vmatprep.mubr.f32.mxu0 0.0
  %1263 = vmatmul.mubr.f32.gmra.mrb[0].mxu0 %v1019
  %v1264 = vpop.f32.mrb[0].mxu0
  %v1265 = vadd.f32 %v917, %v1264
  %v1266 = vpop.f32.mrb[0].mxu0
  %v1267 = vadd.f32 %v921, %v1266
  %1268 = vmatprep.mubr.f32.mxu0 0.0
  %1269 = vmatmul.mubr.f32.gmra.mrb[0].mxu0 %v1022
  %v1270 = vpop.f32.mrb[0].mxu0
  %v1271 = vadd.f32 %v917, %v1270
  %v1272 = vpop.f32.mrb[0].mxu0
  %v1273 = vadd.f32 %v921, %v1272
  %1274 = vmatprep.mubr.f32.mxu0 0.0
  %1275 = vmatmul.mubr.f32.gmra.mrb[0].mxu0 %v1025
  %v1276 = vpop.f32.mrb[0].mxu0
  %v1277 = vadd.f32 %v917, %v1276
  %v1278 = vpop.f32.mrb[0].mxu0
  %v1279 = vadd.f32 %v921, %v1278
  %1280 = vmatprep.mubr.f32.mxu0 0.0
  %1281 = vmatmul.mubr.f32.gmra.mrb[0].mxu0 %v1028
  %v1282 = vpop.f32.mrb[0].mxu0
  %v1283 = vadd.f32 %v917, %v1282
  %v1284 = vpop.f32.mrb[0].mxu0
  %v1285 = vadd.f32 %v921, %v1284
  %1286 = vdwg.mxu0
  %1287 = vmatprep.subr.mxu0 %v891
  %1288 = vmatpush1.msra.mxu0 %v890
  %1289 = vmatprep.subr.mxu0 %v895
  %1290 = vmatpush1.msra.mxu0 %v894
  %1291 = vmatprep.subr.mxu0 %v899
  %1292 = vmatpush1.msra.mxu0 %v898
  %1293 = vmatprep.subr.mxu0 %v903
  %1294 = vmatpush1.msra.mxu0 %v902
  %1295 = vmatprep.subr.mxu0 %v907
  %1296 = vmatpush1.msra.mxu0 %v906
  %1297 = vmatprep.subr.mxu0 %v911
  %1298 = vmatpush1.msra.mxu0 %v910
  %1299 = vmatprep.subr.mxu0 0.0
  %1300 = vmatpush1.msra.mxu0 0.0
  %1301 = vmatprep.subr.mxu0 0.0
  %1302 = vmatpush1.msra.mxu0 0.0
  %1303 = vmatprep.subr.mxu0 0.0
  %1304 = vmatpush1.msra.mxu0 0.0
  %1305 = vmatprep.subr.mxu0 0.0
  %1306 = vmatpush1.msra.mxu0 0.0
  %1307 = vmatprep.subr.mxu0 0.0
  %1308 = vmatpush1.msra.mxu0 0.0
  %1309 = vmatprep.subr.mxu0 0.0
  %1310 = vmatpush1.msra.mxu0 0.0
  %1311 = vmatprep.subr.mxu0 0.0
  %1312 = vmatpush1.msra.mxu0 0.0
  %1313 = vmatprep.subr.mxu0 0.0
  %1314 = vmatpush1.msra.mxu0 0.0
  %1315 = vmatprep.subr.mxu0 0.0
  %1316 = vmatpush1.msra.mxu0 0.0
  %1317 = vmatprep.subr.mxu0 0.0
  %1318 = vmatpush1.msra.mxu0 0.0
  %1319 = vmatprep.subr.mxu0 0.0
  %1320 = vmatpush1.msra.mxu0 0.0
  %1321 = vmatprep.subr.mxu0 0.0
  %1322 = vmatpush1.msra.mxu0 0.0
  %1323 = vmatprep.subr.mxu0 0.0
  %1324 = vmatpush1.msra.mxu0 0.0
  %1325 = vmatprep.subr.mxu0 0.0
  %1326 = vmatpush1.msra.mxu0 0.0
  %1327 = vmatprep.subr.mxu0 0.0
  %1328 = vmatpush1.msra.mxu0 0.0
  %1329 = vmatprep.subr.mxu0 0.0
  %1330 = vmatpush1.msra.mxu0 0.0
  %1331 = vmatprep.subr.mxu0 0.0
  %1332 = vmatpush1.msra.mxu0 0.0
  %1333 = vmatprep.subr.mxu0 0.0
  %1334 = vmatpush1.msra.mxu0 0.0
  %1335 = vmatprep.subr.mxu0 0.0
  %1336 = vmatpush1.msra.mxu0 0.0
  %1337 = vmatprep.subr.mxu0 0.0
  %1338 = vmatpush1.msra.mxu0 0.0
  %1339 = vmatprep.subr.mxu0 0.0
  %1340 = vmatpush1.msra.mxu0 0.0
  %1341 = vmatprep.subr.mxu0 0.0
  %1342 = vmatpush1.msra.mxu0 0.0
  %1343 = vmatprep.subr.mxu0 0.0
  %1344 = vmatpush1.msra.mxu0 0.0
  %1345 = vmatprep.subr.mxu0 0.0
  %1346 = vmatpush1.msra.mxu0 0.0
  %1347 = vmatprep.subr.mxu0 0.0
  %1348 = vmatpush1.msra.mxu0 0.0
  %1349 = vmatprep.subr.mxu0 0.0
  %1350 = vmatpush1.msra.mxu0 0.0
  %1351 = vmatprep.mubr.f32.mxu0 0.0
  %1352 = vmatmul.mubr.f32.gmra.mrb[0].mxu0 %v935
  %v1353 = vpop.f32.mrb[0].mxu0
  %v1354 = vadd.f32 %v925, %v1353
  %v1355 = vpop.f32.mrb[0].mxu0
  %v1356 = vadd.f32 %v929, %v1355
  %1357 = vmatprep.mubr.f32.mxu0 0.0
  %1358 = vmatmul.mubr.f32.gmra.mrb[0].mxu0 %v938
  %v1359 = vpop.f32.mrb[0].mxu0
  %v1360 = vadd.f32 %v925, %v1359
  %v1361 = vpop.f32.mrb[0].mxu0
  %v1362 = vadd.f32 %v929, %v1361
  %1363 = vmatprep.mubr.f32.mxu0 0.0
  %1364 = vmatmul.mubr.f32.gmra.mrb[0].mxu0 %v941
  %v1365 = vpop.f32.mrb[0].mxu0
  %v1366 = vadd.f32 %v925, %v1365
  %v1367 = vpop.f32.mrb[0].mxu0
  %v1368 = vadd.f32 %v929, %v1367
  %1369 = vmatprep.mubr.f32.mxu0 0.0
  %1370 = vmatmul.mubr.f32.gmra.mrb[0].mxu0 %v944
  %v1371 = vpop.f32.mrb[0].mxu0
  %v1372 = vadd.f32 %v925, %v1371
  %v1373 = vpop.f32.mrb[0].mxu0
  %v1374 = vadd.f32 %v929, %v1373
  %1375 = vmatprep.mubr.f32.mxu0 0.0
  %1376 = vmatmul.mubr.f32.gmra.mrb[0].mxu0 %v947
  %v1377 = vpop.f32.mrb[0].mxu0
  %v1378 = vadd.f32 %v925, %v1377
  %v1379 = vpop.f32.mrb[0].mxu0
  %v1380 = vadd.f32 %v929, %v1379
  %1381 = vmatprep.mubr.f32.mxu0 0.0
  %1382 = vmatmul.mubr.f32.gmra.mrb[0].mxu0 %v950
  %v1383 = vpop.f32.mrb[0].mxu0
  %v1384 = vadd.f32 %v925, %v1383
  %v1385 = vpop.f32.mrb[0].mxu0
  %v1386 = vadd.f32 %v929, %v1385
  %1387 = vmatprep.mubr.f32.mxu0 0.0
  %1388 = vmatmul.mubr.f32.gmra.mrb[0].mxu0 %v953
  %v1389 = vpop.f32.mrb[0].mxu0
  %v1390 = vadd.f32 %v925, %v1389
  %v1391 = vpop.f32.mrb[0].mxu0
  %v1392 = vadd.f32 %v929, %v1391
  %1393 = vmatprep.mubr.f32.mxu0 0.0
  %1394 = vmatmul.mubr.f32.gmra.mrb[0].mxu0 %v956
  %v1395 = vpop.f32.mrb[0].mxu0
  %v1396 = vadd.f32 %v925, %v1395
  %v1397 = vpop.f32.mrb[0].mxu0
  %v1398 = vadd.f32 %v929, %v1397
  %1399 = vmatprep.mubr.f32.mxu0 0.0
  %1400 = vmatmul.mubr.f32.gmra.mrb[0].mxu0 %v959
  %v1401 = vpop.f32.mrb[0].mxu0
  %v1402 = vadd.f32 %v925, %v1401
  %v1403 = vpop.f32.mrb[0].mxu0
  %v1404 = vadd.f32 %v929, %v1403
  %1405 = vmatprep.mubr.f32.mxu0 0.0
  %1406 = vmatmul.mubr.f32.gmra.mrb[0].mxu0 %v962
  %v1407 = vpop.f32.mrb[0].mxu0
  %v1408 = vadd.f32 %v925, %v1407
  %v1409 = vpop.f32.mrb[0].mxu0
  %v1410 = vadd.f32 %v929, %v1409
  %1411 = vmatprep.mubr.f32.mxu0 0.0
  %1412 = vmatmul.mubr.f32.gmra.mrb[0].mxu0 %v965
  %v1413 = vpop.f32.mrb[0].mxu0
  %v1414 = vadd.f32 %v925, %v1413
  %v1415 = vpop.f32.mrb[0].mxu0
  %v1416 = vadd.f32 %v929, %v1415
  %1417 = vmatprep.mubr.f32.mxu0 0.0
  %1418 = vmatmul.mubr.f32.gmra.mrb[0].mxu0 %v968
  %v1419 = vpop.f32.mrb[0].mxu0
  %v1420 = vadd.f32 %v925, %v1419
  %v1421 = vpop.f32.mrb[0].mxu0
  %v1422 = vadd.f32 %v929, %v1421
  %1423 = vmatprep.mubr.f32.mxu0 0.0
  %1424 = vmatmul.mubr.f32.gmra.mrb[0].mxu0 %v971
  %v1425 = vpop.f32.mrb[0].mxu0
  %v1426 = vadd.f32 %v925, %v1425
  %v1427 = vpop.f32.mrb[0].mxu0
  %v1428 = vadd.f32 %v929, %v1427
  %1429 = vmatprep.mubr.f32.mxu0 0.0
  %1430 = vmatmul.mubr.f32.gmra.mrb[0].mxu0 %v974
  %v1431 = vpop.f32.mrb[0].mxu0
  %v1432 = vadd.f32 %v925, %v1431
  %v1433 = vpop.f32.mrb[0].mxu0
  %v1434 = vadd.f32 %v929, %v1433
  %1435 = vmatprep.mubr.f32.mxu0 0.0
  %1436 = vmatmul.mubr.f32.gmra.mrb[0].mxu0 %v977
  %v1437 = vpop.f32.mrb[0].mxu0
  %v1438 = vadd.f32 %v925, %v1437
  %v1439 = vpop.f32.mrb[0].mxu0
  %v1440 = vadd.f32 %v929, %v1439
  %1441 = vmatprep.mubr.f32.mxu0 0.0
  %1442 = vmatmul.mubr.f32.gmra.mrb[0].mxu0 %v980
  %v1443 = vpop.f32.mrb[0].mxu0
  %v1444 = vadd.f32 %v925, %v1443
  %v1445 = vpop.f32.mrb[0].mxu0
  %v1446 = vadd.f32 %v929, %v1445
  %1447 = vmatprep.mubr.f32.mxu0 0.0
  %1448 = vmatmul.mubr.f32.gmra.mrb[0].mxu0 %v983
  %v1449 = vpop.f32.mrb[0].mxu0
  %v1450 = vadd.f32 %v925, %v1449
  %v1451 = vpop.f32.mrb[0].mxu0
  %v1452 = vadd.f32 %v929, %v1451
  %1453 = vmatprep.mubr.f32.mxu0 0.0
  %1454 = vmatmul.mubr.f32.gmra.mrb[0].mxu0 %v986
  %v1455 = vpop.f32.mrb[0].mxu0
  %v1456 = vadd.f32 %v925, %v1455
  %v1457 = vpop.f32.mrb[0].mxu0
  %v1458 = vadd.f32 %v929, %v1457
  %1459 = vmatprep.mubr.f32.mxu0 0.0
  %1460 = vmatmul.mubr.f32.gmra.mrb[0].mxu0 %v989
  %v1461 = vpop.f32.mrb[0].mxu0
  %v1462 = vadd.f32 %v925, %v1461
  %v1463 = vpop.f32.mrb[0].mxu0
  %v1464 = vadd.f32 %v929, %v1463
  %1465 = vmatprep.mubr.f32.mxu0 0.0
  %1466 = vmatmul.mubr.f32.gmra.mrb[0].mxu0 %v992
  %v1467 = vpop.f32.mrb[0].mxu0
  %v1468 = vadd.f32 %v925, %v1467
  %v1469 = vpop.f32.mrb[0].mxu0
  %v1470 = vadd.f32 %v929, %v1469
  %1471 = vmatprep.mubr.f32.mxu0 0.0
  %1472 = vmatmul.mubr.f32.gmra.mrb[0].mxu0 %v995
  %v1473 = vpop.f32.mrb[0].mxu0
  %v1474 = vadd.f32 %v925, %v1473
  %v1475 = vpop.f32.mrb[0].mxu0
  %v1476 = vadd.f32 %v929, %v1475
  %1477 = vmatprep.mubr.f32.mxu0 0.0
  %1478 = vmatmul.mubr.f32.gmra.mrb[0].mxu0 %v998
  %v1479 = vpop.f32.mrb[0].mxu0
  %v1480 = vadd.f32 %v925, %v1479
  %v1481 = vpop.f32.mrb[0].mxu0
  %v1482 = vadd.f32 %v929, %v1481
  %1483 = vmatprep.mubr.f32.mxu0 0.0
  %1484 = vmatmul.mubr.f32.gmra.mrb[0].mxu0 %v1001
  %v1485 = vpop.f32.mrb[0].mxu0
  %v1486 = vadd.f32 %v925, %v1485
  %v1487 = vpop.f32.mrb[0].mxu0
  %v1488 = vadd.f32 %v929, %v1487
  %1489 = vmatprep.mubr.f32.mxu0 0.0
  %1490 = vmatmul.mubr.f32.gmra.mrb[0].mxu0 %v1004
  %v1491 = vpop.f32.mrb[0].mxu0
  %v1492 = vadd.f32 %v925, %v1491
  %v1493 = vpop.f32.mrb[0].mxu0
  %v1494 = vadd.f32 %v929, %v1493
  %1495 = vmatprep.mubr.f32.mxu0 0.0
  %1496 = vmatmul.mubr.f32.gmra.mrb[0].mxu0 %v1007
  %v1497 = vpop.f32.mrb[0].mxu0
  %v1498 = vadd.f32 %v925, %v1497
  %v1499 = vpop.f32.mrb[0].mxu0
  %v1500 = vadd.f32 %v929, %v1499
  %1501 = vmatprep.mubr.f32.mxu0 0.0
  %1502 = vmatmul.mubr.f32.gmra.mrb[0].mxu0 %v1010
  %v1503 = vpop.f32.mrb[0].mxu0
  %v1504 = vadd.f32 %v925, %v1503
  %v1505 = vpop.f32.mrb[0].mxu0
  %v1506 = vadd.f32 %v929, %v1505
  %1507 = vmatprep.mubr.f32.mxu0 0.0
  %1508 = vmatmul.mubr.f32.gmra.mrb[0].mxu0 %v1013
  %v1509 = vpop.f32.mrb[0].mxu0
  %v1510 = vadd.f32 %v925, %v1509
  %v1511 = vpop.f32.mrb[0].mxu0
  %v1512 = vadd.f32 %v929, %v1511
  %1513 = vmatprep.mubr.f32.mxu0 0.0
  %1514 = vmatmul.mubr.f32.gmra.mrb[0].mxu0 %v1016
  %v1515 = vpop.f32.mrb[0].mxu0
  %v1516 = vadd.f32 %v925, %v1515
  %v1517 = vpop.f32.mrb[0].mxu0
  %v1518 = vadd.f32 %v929, %v1517
  %1519 = vmatprep.mubr.f32.mxu0 0.0
  %1520 = vmatmul.mubr.f32.gmra.mrb[0].mxu0 %v1019
  %v1521 = vpop.f32.mrb[0].mxu0
  %v1522 = vadd.f32 %v925, %v1521
  %v1523 = vpop.f32.mrb[0].mxu0
  %v1524 = vadd.f32 %v929, %v1523
  %1525 = vmatprep.mubr.f32.mxu0 0.0
  %1526 = vmatmul.mubr.f32.gmra.mrb[0].mxu0 %v1022
  %v1527 = vpop.f32.mrb[0].mxu0
  %v1528 = vadd.f32 %v925, %v1527
  %v1529 = vpop.f32.mrb[0].mxu0
  %v1530 = vadd.f32 %v929, %v1529
  %1531 = vmatprep.mubr.f32.mxu0 0.0
  %1532 = vmatmul.mubr.f32.gmra.mrb[0].mxu0 %v1025
  %v1533 = vpop.f32.mrb[0].mxu0
  %v1534 = vadd.f32 %v925, %v1533
  %v1535 = vpop.f32.mrb[0].mxu0
  %v1536 = vadd.f32 %v929, %v1535
  %1537 = vmatprep.mubr.f32.mxu0 0.0
  %1538 = vmatmul.mubr.f32.gmra.mrb[0].mxu0 %v1028
  %v1539 = vpop.f32.mrb[0].mxu0
  %v1540 = vadd.f32 %v925, %v1539
  %v1541 = vpop.f32.mrb[0].mxu0
  %v1542 = vadd.f32 %v929, %v1541
  %1543 = vdwg.mxu0
  %1544 = vmax.xlane.f32.xlu0 %v1097
  %v1545 = vpop.xlane.xlu0 %1544
  %1546 = vmax.xlane.f32.xlu0 %v1103
  %v1547 = vpop.xlane.xlu0 %1546
  %1548 = vmax.xlane.f32.xlu0 %v1109
  %v1549 = vpop.xlane.xlu0 %1548
  %1550 = vmax.xlane.f32.xlu0 %v1115
  %v1551 = vpop.xlane.xlu0 %1550
  %1552 = vmax.xlane.f32.xlu0 %v1121
  %v1553 = vpop.xlane.xlu0 %1552
  %1554 = vmax.xlane.f32.xlu0 %v1127
  %v1555 = vpop.xlane.xlu0 %1554
  %1556 = vmax.xlane.f32.xlu0 %v1133
  %v1557 = vpop.xlane.xlu0 %1556
  %1558 = vmax.xlane.f32.xlu0 %v1139
  %v1559 = vpop.xlane.xlu0 %1558
  %1560 = vmax.xlane.f32.xlu0 %v1145
  %v1561 = vpop.xlane.xlu0 %1560
  %1562 = vmax.xlane.f32.xlu0 %v1151
  %v1563 = vpop.xlane.xlu0 %1562
  %1564 = vmax.xlane.f32.xlu0 %v1157
  %v1565 = vpop.xlane.xlu0 %1564
  %1566 = vmax.xlane.f32.xlu0 %v1163
  %v1567 = vpop.xlane.xlu0 %1566
  %1568 = vmax.xlane.f32.xlu0 %v1169
  %v1569 = vpop.xlane.xlu0 %1568
  %1570 = vmax.xlane.f32.xlu0 %v1175
  %v1571 = vpop.xlane.xlu0 %1570
  %1572 = vmax.xlane.f32.xlu0 %v1181
  %v1573 = vpop.xlane.xlu0 %1572
  %1574 = vmax.xlane.f32.xlu0 %v1187
  %v1575 = vpop.xlane.xlu0 %1574
  %1576 = vmax.xlane.f32.xlu0 %v1193
  %v1577 = vpop.xlane.xlu0 %1576
  %1578 = vmax.xlane.f32.xlu0 %v1199
  %v1579 = vpop.xlane.xlu0 %1578
  %1580 = vmax.xlane.f32.xlu0 %v1205
  %v1581 = vpop.xlane.xlu0 %1580
  %1582 = vmax.xlane.f32.xlu0 %v1211
  %v1583 = vpop.xlane.xlu0 %1582
  %1584 = vmax.xlane.f32.xlu0 %v1217
  %v1585 = vpop.xlane.xlu0 %1584
  %1586 = vmax.xlane.f32.xlu0 %v1223
  %v1587 = vpop.xlane.xlu0 %1586
  %1588 = vmax.xlane.f32.xlu0 %v1229
  %v1589 = vpop.xlane.xlu0 %1588
  %1590 = vmax.xlane.f32.xlu0 %v1235
  %v1591 = vpop.xlane.xlu0 %1590
  %1592 = vmax.xlane.f32.xlu0 %v1241
  %v1593 = vpop.xlane.xlu0 %1592
  %1594 = vmax.xlane.f32.xlu0 %v1247
  %v1595 = vpop.xlane.xlu0 %1594
  %1596 = vmax.xlane.f32.xlu0 %v1253
  %v1597 = vpop.xlane.xlu0 %1596
  %1598 = vmax.xlane.f32.xlu0 %v1259
  %v1599 = vpop.xlane.xlu0 %1598
  %1600 = vmax.xlane.f32.xlu0 %v1265
  %v1601 = vpop.xlane.xlu0 %1600
  %1602 = vmax.xlane.f32.xlu0 %v1271
  %v1603 = vpop.xlane.xlu0 %1602
  %1604 = vmax.xlane.f32.xlu0 %v1277
  %v1605 = vpop.xlane.xlu0 %1604
  %1606 = vmax.xlane.f32.xlu0 %v1283
  %v1607 = vpop.xlane.xlu0 %1606
  %v1608 = vsub.f32 %v1097, %v1545
  %v1609 = vsub.f32 %v1103, %v1547
  %v1610 = vsub.f32 %v1109, %v1549
  %v1611 = vsub.f32 %v1115, %v1551
  %v1612 = vsub.f32 %v1121, %v1553
  %v1613 = vsub.f32 %v1127, %v1555
  %v1614 = vsub.f32 %v1133, %v1557
  %v1615 = vsub.f32 %v1139, %v1559
  %v1616 = vsub.f32 %v1145, %v1561
  %v1617 = vsub.f32 %v1151, %v1563
  %v1618 = vsub.f32 %v1157, %v1565
  %v1619 = vsub.f32 %v1163, %v1567
  %v1620 = vsub.f32 %v1169, %v1569
  %v1621 = vsub.f32 %v1175, %v1571
  %v1622 = vsub.f32 %v1181, %v1573
  %v1623 = vsub.f32 %v1187, %v1575
  %v1624 = vsub.f32 %v1193, %v1577
  %v1625 = vsub.f32 %v1199, %v1579
  %v1626 = vsub.f32 %v1205, %v1581
  %v1627 = vsub.f32 %v1211, %v1583
  %v1628 = vsub.f32 %v1217, %v1585
  %v1629 = vsub.f32 %v1223, %v1587
  %v1630 = vsub.f32 %v1229, %v1589
  %v1631 = vsub.f32 %v1235, %v1591
  %v1632 = vsub.f32 %v1241, %v1593
  %v1633 = vsub.f32 %v1247, %v1595
  %v1634 = vsub.f32 %v1253, %v1597
  %v1635 = vsub.f32 %v1259, %v1599
  %v1636 = vsub.f32 %v1265, %v1601
  %v1637 = vsub.f32 %v1271, %v1603
  %v1638 = vsub.f32 %v1277, %v1605
  %v1639 = vsub.f32 %v1283, %v1607
  %v1640 = vmul.f32 %v1608, 1.442695
  %v1641 = vpow.pop %v1640
  %v1642 = vmul.f32 %v1609, 1.442695
  %v1643 = vpow.pop %v1642
  %v1644 = vmul.f32 %v1610, 1.442695
  %v1645 = vpow.pop %v1644
  %v1646 = vmul.f32 %v1611, 1.442695
  %v1647 = vpow.pop %v1646
  %v1648 = vmul.f32 %v1612, 1.442695
  %v1649 = vpow.pop %v1648
  %v1650 = vmul.f32 %v1613, 1.442695
  %v1651 = vpow.pop %v1650
  %v1652 = vmul.f32 %v1614, 1.442695
  %v1653 = vpow.pop %v1652
  %v1654 = vmul.f32 %v1615, 1.442695
  %v1655 = vpow.pop %v1654
  %v1656 = vmul.f32 %v1616, 1.442695
  %v1657 = vpow.pop %v1656
  %v1658 = vmul.f32 %v1617, 1.442695
  %v1659 = vpow.pop %v1658
  %v1660 = vmul.f32 %v1618, 1.442695
  %v1661 = vpow.pop %v1660
  %v1662 = vmul.f32 %v1619, 1.442695
  %v1663 = vpow.pop %v1662
  %v1664 = vmul.f32 %v1620, 1.442695
  %v1665 = vpow.pop %v1664
  %v1666 = vmul.f32 %v1621, 1.442695
  %v1667 = vpow.pop %v1666
  %v1668 = vmul.f32 %v1622, 1.442695
  %v1669 = vpow.pop %v1668
  %v1670 = vmul.f32 %v1623, 1.442695
  %v1671 = vpow.pop %v1670
  %v1672 = vmul.f32 %v1624, 1.442695
  %v1673 = vpow.pop %v1672
  %v1674 = vmul.f32 %v1625, 1.442695
  %v1675 = vpow.pop %v1674
  %v1676 = vmul.f32 %v1626, 1.442695
  %v1677 = vpow.pop %v1676
  %v1678 = vmul.f32 %v1627, 1.442695
  %v1679 = vpow.pop %v1678
  %v1680 = vmul.f32 %v1628, 1.442695
  %v1681 = vpow.pop %v1680
  %v1682 = vmul.f32 %v1629, 1.442695
  %v1683 = vpow.pop %v1682
  %v1684 = vmul.f32 %v1630, 1.442695
  %v1685 = vpow.pop %v1684
  %v1686 = vmul.f32 %v1631, 1.442695
  %v1687 = vpow.pop %v1686
  %v1688 = vmul.f32 %v1632, 1.442695
  %v1689 = vpow.pop %v1688
  %v1690 = vmul.f32 %v1633, 1.442695
  %v1691 = vpow.pop %v1690
  %v1692 = vmul.f32 %v1634, 1.442695
  %v1693 = vpow.pop %v1692
  %v1694 = vmul.f32 %v1635, 1.442695
  %v1695 = vpow.pop %v1694
  %v1696 = vmul.f32 %v1636, 1.442695
  %v1697 = vpow.pop %v1696
  %v1698 = vmul.f32 %v1637, 1.442695
  %v1699 = vpow.pop %v1698
  %v1700 = vmul.f32 %v1638, 1.442695
  %v1701 = vpow.pop %v1700
  %v1702 = vmul.f32 %v1639, 1.442695
  %v1703 = vpow.pop %v1702
  %1704 = vadd.xlane.f32.xlu0 %v1641
  %v1705 = vpop.xlane.xlu0 %1704
  %1706 = vadd.xlane.f32.xlu0 %v1643
  %v1707 = vpop.xlane.xlu0 %1706
  %1708 = vadd.xlane.f32.xlu0 %v1645
  %v1709 = vpop.xlane.xlu0 %1708
  %1710 = vadd.xlane.f32.xlu0 %v1647
  %v1711 = vpop.xlane.xlu0 %1710
  %1712 = vadd.xlane.f32.xlu0 %v1649
  %v1713 = vpop.xlane.xlu0 %1712
  %1714 = vadd.xlane.f32.xlu0 %v1651
  %v1715 = vpop.xlane.xlu0 %1714
  %1716 = vadd.xlane.f32.xlu0 %v1653
  %v1717 = vpop.xlane.xlu0 %1716
  %1718 = vadd.xlane.f32.xlu0 %v1655
  %v1719 = vpop.xlane.xlu0 %1718
  %1720 = vadd.xlane.f32.xlu0 %v1657
  %v1721 = vpop.xlane.xlu0 %1720
  %1722 = vadd.xlane.f32.xlu0 %v1659
  %v1723 = vpop.xlane.xlu0 %1722
  %1724 = vadd.xlane.f32.xlu0 %v1661
  %v1725 = vpop.xlane.xlu0 %1724
  %1726 = vadd.xlane.f32.xlu0 %v1663
  %v1727 = vpop.xlane.xlu0 %1726
  %1728 = vadd.xlane.f32.xlu0 %v1665
  %v1729 = vpop.xlane.xlu0 %1728
  %1730 = vadd.xlane.f32.xlu0 %v1667
  %v1731 = vpop.xlane.xlu0 %1730
  %1732 = vadd.xlane.f32.xlu0 %v1669
  %v1733 = vpop.xlane.xlu0 %1732
  %1734 = vadd.xlane.f32.xlu0 %v1671
  %v1735 = vpop.xlane.xlu0 %1734
  %1736 = vadd.xlane.f32.xlu0 %v1673
  %v1737 = vpop.xlane.xlu0 %1736
  %1738 = vadd.xlane.f32.xlu0 %v1675
  %v1739 = vpop.xlane.xlu0 %1738
  %1740 = vadd.xlane.f32.xlu0 %v1677
  %v1741 = vpop.xlane.xlu0 %1740
  %1742 = vadd.xlane.f32.xlu0 %v1679
  %v1743 = vpop.xlane.xlu0 %1742
  %1744 = vadd.xlane.f32.xlu0 %v1681
  %v1745 = vpop.xlane.xlu0 %1744
  %1746 = vadd.xlane.f32.xlu0 %v1683
  %v1747 = vpop.xlane.xlu0 %1746
  %1748 = vadd.xlane.f32.xlu0 %v1685
  %v1749 = vpop.xlane.xlu0 %1748
  %1750 = vadd.xlane.f32.xlu0 %v1687
  %v1751 = vpop.xlane.xlu0 %1750
  %1752 = vadd.xlane.f32.xlu0 %v1689
  %v1753 = vpop.xlane.xlu0 %1752
  %1754 = vadd.xlane.f32.xlu0 %v1691
  %v1755 = vpop.xlane.xlu0 %1754
  %1756 = vadd.xlane.f32.xlu0 %v1693
  %v1757 = vpop.xlane.xlu0 %1756
  %1758 = vadd.xlane.f32.xlu0 %v1695
  %v1759 = vpop.xlane.xlu0 %1758
  %1760 = vadd.xlane.f32.xlu0 %v1697
  %v1761 = vpop.xlane.xlu0 %1760
  %1762 = vadd.xlane.f32.xlu0 %v1699
  %v1763 = vpop.xlane.xlu0 %1762
  %1764 = vadd.xlane.f32.xlu0 %v1701
  %v1765 = vpop.xlane.xlu0 %1764
  %1766 = vadd.xlane.f32.xlu0 %v1703
  %v1767 = vpop.xlane.xlu0 %1766
  %v1768 = vrcp.pop %v1705
  %v1769 = vrcp.pop %v1707
  %v1770 = vrcp.pop %v1709
  %v1771 = vrcp.pop %v1711
  %v1772 = vrcp.pop %v1713
  %v1773 = vrcp.pop %v1715
  %v1774 = vrcp.pop %v1717
  %v1775 = vrcp.pop %v1719
  %v1776 = vrcp.pop %v1721
  %v1777 = vrcp.pop %v1723
  %v1778 = vrcp.pop %v1725
  %v1779 = vrcp.pop %v1727
  %v1780 = vrcp.pop %v1729
  %v1781 = vrcp.pop %v1731
  %v1782 = vrcp.pop %v1733
  %v1783 = vrcp.pop %v1735
  %v1784 = vrcp.pop %v1737
  %v1785 = vrcp.pop %v1739
  %v1786 = vrcp.pop %v1741
  %v1787 = vrcp.pop %v1743
  %v1788 = vrcp.pop %v1745
  %v1789 = vrcp.pop %v1747
  %v1790 = vrcp.pop %v1749
  %v1791 = vrcp.pop %v1751
  %v1792 = vrcp.pop %v1753
  %v1793 = vrcp.pop %v1755
  %v1794 = vrcp.pop %v1757
  %v1795 = vrcp.pop %v1759
  %v1796 = vrcp.pop %v1761
  %v1797 = vrcp.pop %v1763
  %v1798 = vrcp.pop %v1765
  %v1799 = vrcp.pop %v1767
  %v1800 = vmul.f32 %v1641, %v1768
  %v1801 = vmul.f32 %v1643, %v1769
  %v1802 = vmul.f32 %v1645, %v1770
  %v1803 = vmul.f32 %v1647, %v1771
  %v1804 = vmul.f32 %v1649, %v1772
  %v1805 = vmul.f32 %v1651, %v1773
  %v1806 = vmul.f32 %v1653, %v1774
  %v1807 = vmul.f32 %v1655, %v1775
  %v1808 = vmul.f32 %v1657, %v1776
  %v1809 = vmul.f32 %v1659, %v1777
  %v1810 = vmul.f32 %v1661, %v1778
  %v1811 = vmul.f32 %v1663, %v1779
  %v1812 = vmul.f32 %v1665, %v1780
  %v1813 = vmul.f32 %v1667, %v1781
  %v1814 = vmul.f32 %v1669, %v1782
  %v1815 = vmul.f32 %v1671, %v1783
  %v1816 = vmul.f32 %v1673, %v1784
  %v1817 = vmul.f32 %v1675, %v1785
  %v1818 = vmul.f32 %v1677, %v1786
  %v1819 = vmul.f32 %v1679, %v1787
  %v1820 = vmul.f32 %v1681, %v1788
  %v1821 = vmul.f32 %v1683, %v1789
  %v1822 = vmul.f32 %v1685, %v1790
  %v1823 = vmul.f32 %v1687, %v1791
  %v1824 = vmul.f32 %v1689, %v1792
  %v1825 = vmul.f32 %v1691, %v1793
  %v1826 = vmul.f32 %v1693, %v1794
  %v1827 = vmul.f32 %v1695, %v1795
  %v1828 = vmul.f32 %v1697, %v1796
  %v1829 = vmul.f32 %v1699, %v1797
  %v1830 = vmul.f32 %v1701, %v1798
  %v1831 = vmul.f32 %v1703, %v1799
  %1832 = vst [vmem:[%s6] sm:$0xff] %v1800
  %1833 = vst [vmem:[%s6 + $0x8] sm:$0xff] %v1801
  %1834 = vst [vmem:[%s6 + $0x10] sm:$0xff] %v1802
  %1835 = vst [vmem:[%s6 + $0x18] sm:$0xff] %v1803
  %1836 = vst [vmem:[%s6 + $0x20] sm:$0xff] %v1804
  %1837 = vst [vmem:[%s6 + $0x28] sm:$0xff] %v1805
  %1838 = vst [vmem:[%s6 + $0x30] sm:$0xff] %v1806
  %1839 = vst [vmem:[%s6 + $0x38] sm:$0xff] %v1807
  %1840 = vst [vmem:[%s6 + $0x40] sm:$0xff] %v1808
  %1841 = vst [vmem:[%s6 + $0x48] sm:$0xff] %v1809
  %1842 = vst [vmem:[%s6 + $0x50] sm:$0xff] %v1810
  %1843 = vst [vmem:[%s6 + $0x58] sm:$0xff] %v1811
  %1844 = vst [vmem:[%s6 + $0x60] sm:$0xff] %v1812
  %1845 = vst [vmem:[%s6 + $0x68] sm:$0xff] %v1813
  %1846 = vst [vmem:[%s6 + $0x70] sm:$0xff] %v1814
  %1847 = vst [vmem:[%s6 + $0x78] sm:$0xff] %v1815
  %1848 = vst [vmem:[%s6 + $0x80] sm:$0xff] %v1816
  %1849 = vst [vmem:[%s6 + $0x88] sm:$0xff] %v1817
  %1850 = vst [vmem:[%s6 + $0x90] sm:$0xff] %v1818
  %1851 = vst [vmem:[%s6 + $0x98] sm:$0xff] %v1819
  %1852 = vst [vmem:[%s6 + $0xa0] sm:$0xff] %v1820
  %1853 = vst [vmem:[%s6 + $0xa8] sm:$0xff] %v1821
  %1854 = vst [vmem:[%s6 + $0xb0] sm:$0xff] %v1822
  %1855 = vst [vmem:[%s6 + $0xb8] sm:$0xff] %v1823
  %1856 = vst [vmem:[%s6 + $0xc0] sm:$0xff] %v1824
  %1857 = vst [vmem:[%s6 + $0xc8] sm:$0xff] %v1825
  %1858 = vst [vmem:[%s6 + $0xd0] sm:$0xff] %v1826
  %1859 = vst [vmem:[%s6 + $0xd8] sm:$0xff] %v1827
  %1860 = vst [vmem:[%s6 + $0xe0] sm:$0xff] %v1828
  %1861 = vst [vmem:[%s6 + $0xe8] sm:$0xff] %v1829
  %1862 = vst [vmem:[%s6 + $0xf0] sm:$0xff] %v1830
  %1863 = vst [vmem:[%s6 + $0xf8] sm:$0xff] %v1831
  %1864 = vmax.xlane.f32.xlu0 %v1099
  %v1865 = vpop.xlane.xlu0 %1864
  %1866 = vmax.xlane.f32.xlu0 %v1105
  %v1867 = vpop.xlane.xlu0 %1866
  %1868 = vmax.xlane.f32.xlu0 %v1111
  %v1869 = vpop.xlane.xlu0 %1868
  %1870 = vmax.xlane.f32.xlu0 %v1117
  %v1871 = vpop.xlane.xlu0 %1870
  %1872 = vmax.xlane.f32.xlu0 %v1123
  %v1873 = vpop.xlane.xlu0 %1872
  %1874 = vmax.xlane.f32.xlu0 %v1129
  %v1875 = vpop.xlane.xlu0 %1874
  %1876 = vmax.xlane.f32.xlu0 %v1135
  %v1877 = vpop.xlane.xlu0 %1876
  %1878 = vmax.xlane.f32.xlu0 %v1141
  %v1879 = vpop.xlane.xlu0 %1878
  %1880 = vmax.xlane.f32.xlu0 %v1147
  %v1881 = vpop.xlane.xlu0 %1880
  %1882 = vmax.xlane.f32.xlu0 %v1153
  %v1883 = vpop.xlane.xlu0 %1882
  %1884 = vmax.xlane.f32.xlu0 %v1159
  %v1885 = vpop.xlane.xlu0 %1884
  %1886 = vmax.xlane.f32.xlu0 %v1165
  %v1887 = vpop.xlane.xlu0 %1886
  %1888 = vmax.xlane.f32.xlu0 %v1171
  %v1889 = vpop.xlane.xlu0 %1888
  %1890 = vmax.xlane.f32.xlu0 %v1177
  %v1891 = vpop.xlane.xlu0 %1890
  %1892 = vmax.xlane.f32.xlu0 %v1183
  %v1893 = vpop.xlane.xlu0 %1892
  %1894 = vmax.xlane.f32.xlu0 %v1189
  %v1895 = vpop.xlane.xlu0 %1894
  %1896 = vmax.xlane.f32.xlu0 %v1195
  %v1897 = vpop.xlane.xlu0 %1896
  %1898 = vmax.xlane.f32.xlu0 %v1201
  %v1899 = vpop.xlane.xlu0 %1898
  %1900 = vmax.xlane.f32.xlu0 %v1207
  %v1901 = vpop.xlane.xlu0 %1900
  %1902 = vmax.xlane.f32.xlu0 %v1213
  %v1903 = vpop.xlane.xlu0 %1902
  %1904 = vmax.xlane.f32.xlu0 %v1219
  %v1905 = vpop.xlane.xlu0 %1904
  %1906 = vmax.xlane.f32.xlu0 %v1225
  %v1907 = vpop.xlane.xlu0 %1906
  %1908 = vmax.xlane.f32.xlu0 %v1231
  %v1909 = vpop.xlane.xlu0 %1908
  %1910 = vmax.xlane.f32.xlu0 %v1237
  %v1911 = vpop.xlane.xlu0 %1910
  %1912 = vmax.xlane.f32.xlu0 %v1243
  %v1913 = vpop.xlane.xlu0 %1912
  %1914 = vmax.xlane.f32.xlu0 %v1249
  %v1915 = vpop.xlane.xlu0 %1914
  %1916 = vmax.xlane.f32.xlu0 %v1255
  %v1917 = vpop.xlane.xlu0 %1916
  %1918 = vmax.xlane.f32.xlu0 %v1261
  %v1919 = vpop.xlane.xlu0 %1918
  %1920 = vmax.xlane.f32.xlu0 %v1267
  %v1921 = vpop.xlane.xlu0 %1920
  %1922 = vmax.xlane.f32.xlu0 %v1273
  %v1923 = vpop.xlane.xlu0 %1922
  %1924 = vmax.xlane.f32.xlu0 %v1279
  %v1925 = vpop.xlane.xlu0 %1924
  %1926 = vmax.xlane.f32.xlu0 %v1285
  %v1927 = vpop.xlane.xlu0 %1926
  %v1928 = vsub.f32 %v1099, %v1865
  %v1929 = vsub.f32 %v1105, %v1867
  %v1930 = vsub.f32 %v1111, %v1869
  %v1931 = vsub.f32 %v1117, %v1871
  %v1932 = vsub.f32 %v1123, %v1873
  %v1933 = vsub.f32 %v1129, %v1875
  %v1934 = vsub.f32 %v1135, %v1877
  %v1935 = vsub.f32 %v1141, %v1879
  %v1936 = vsub.f32 %v1147, %v1881
  %v1937 = vsub.f32 %v1153, %v1883
  %v1938 = vsub.f32 %v1159, %v1885
  %v1939 = vsub.f32 %v1165, %v1887
  %v1940 = vsub.f32 %v1171, %v1889
  %v1941 = vsub.f32 %v1177, %v1891
  %v1942 = vsub.f32 %v1183, %v1893
  %v1943 = vsub.f32 %v1189, %v1895
  %v1944 = vsub.f32 %v1195, %v1897
  %v1945 = vsub.f32 %v1201, %v1899
  %v1946 = vsub.f32 %v1207, %v1901
  %v1947 = vsub.f32 %v1213, %v1903
  %v1948 = vsub.f32 %v1219, %v1905
  %v1949 = vsub.f32 %v1225, %v1907
  %v1950 = vsub.f32 %v1231, %v1909
  %v1951 = vsub.f32 %v1237, %v1911
  %v1952 = vsub.f32 %v1243, %v1913
  %v1953 = vsub.f32 %v1249, %v1915
  %v1954 = vsub.f32 %v1255, %v1917
  %v1955 = vsub.f32 %v1261, %v1919
  %v1956 = vsub.f32 %v1267, %v1921
  %v1957 = vsub.f32 %v1273, %v1923
  %v1958 = vsub.f32 %v1279, %v1925
  %v1959 = vsub.f32 %v1285, %v1927
  %v1960 = vmul.f32 %v1928, 1.442695
  %v1961 = vpow.pop %v1960
  %v1962 = vmul.f32 %v1929, 1.442695
  %v1963 = vpow.pop %v1962
  %v1964 = vmul.f32 %v1930, 1.442695
  %v1965 = vpow.pop %v1964
  %v1966 = vmul.f32 %v1931, 1.442695
  %v1967 = vpow.pop %v1966
  %v1968 = vmul.f32 %v1932, 1.442695
  %v1969 = vpow.pop %v1968
  %v1970 = vmul.f32 %v1933, 1.442695
  %v1971 = vpow.pop %v1970
  %v1972 = vmul.f32 %v1934, 1.442695
  %v1973 = vpow.pop %v1972
  %v1974 = vmul.f32 %v1935, 1.442695
  %v1975 = vpow.pop %v1974
  %v1976 = vmul.f32 %v1936, 1.442695
  %v1977 = vpow.pop %v1976
  %v1978 = vmul.f32 %v1937, 1.442695
  %v1979 = vpow.pop %v1978
  %v1980 = vmul.f32 %v1938, 1.442695
  %v1981 = vpow.pop %v1980
  %v1982 = vmul.f32 %v1939, 1.442695
  %v1983 = vpow.pop %v1982
  %v1984 = vmul.f32 %v1940, 1.442695
  %v1985 = vpow.pop %v1984
  %v1986 = vmul.f32 %v1941, 1.442695
  %v1987 = vpow.pop %v1986
  %v1988 = vmul.f32 %v1942, 1.442695
  %v1989 = vpow.pop %v1988
  %v1990 = vmul.f32 %v1943, 1.442695
  %v1991 = vpow.pop %v1990
  %v1992 = vmul.f32 %v1944, 1.442695
  %v1993 = vpow.pop %v1992
  %v1994 = vmul.f32 %v1945, 1.442695
  %v1995 = vpow.pop %v1994
  %v1996 = vmul.f32 %v1946, 1.442695
  %v1997 = vpow.pop %v1996
  %v1998 = vmul.f32 %v1947, 1.442695
  %v1999 = vpow.pop %v1998
  %v2000 = vmul.f32 %v1948, 1.442695
  %v2001 = vpow.pop %v2000
  %v2002 = vmul.f32 %v1949, 1.442695
  %v2003 = vpow.pop %v2002
  %v2004 = vmul.f32 %v1950, 1.442695
  %v2005 = vpow.pop %v2004
  %v2006 = vmul.f32 %v1951, 1.442695
  %v2007 = vpow.pop %v2006
  %v2008 = vmul.f32 %v1952, 1.442695
  %v2009 = vpow.pop %v2008
  %v2010 = vmul.f32 %v1953, 1.442695
  %v2011 = vpow.pop %v2010
  %v2012 = vmul.f32 %v1954, 1.442695
  %v2013 = vpow.pop %v2012
  %v2014 = vmul.f32 %v1955, 1.442695
  %v2015 = vpow.pop %v2014
  %v2016 = vmul.f32 %v1956, 1.442695
  %v2017 = vpow.pop %v2016
  %v2018 = vmul.f32 %v1957, 1.442695
  %v2019 = vpow.pop %v2018
  %v2020 = vmul.f32 %v1958, 1.442695
  %v2021 = vpow.pop %v2020
  %v2022 = vmul.f32 %v1959, 1.442695
  %v2023 = vpow.pop %v2022
  %2024 = vadd.xlane.f32.xlu0 %v1961
  %v2025 = vpop.xlane.xlu0 %2024
  %2026 = vadd.xlane.f32.xlu0 %v1963
  %v2027 = vpop.xlane.xlu0 %2026
  %2028 = vadd.xlane.f32.xlu0 %v1965
  %v2029 = vpop.xlane.xlu0 %2028
  %2030 = vadd.xlane.f32.xlu0 %v1967
  %v2031 = vpop.xlane.xlu0 %2030
  %2032 = vadd.xlane.f32.xlu0 %v1969
  %v2033 = vpop.xlane.xlu0 %2032
  %2034 = vadd.xlane.f32.xlu0 %v1971
  %v2035 = vpop.xlane.xlu0 %2034
  %2036 = vadd.xlane.f32.xlu0 %v1973
  %v2037 = vpop.xlane.xlu0 %2036
  %2038 = vadd.xlane.f32.xlu0 %v1975
  %v2039 = vpop.xlane.xlu0 %2038
  %2040 = vadd.xlane.f32.xlu0 %v1977
  %v2041 = vpop.xlane.xlu0 %2040
  %2042 = vadd.xlane.f32.xlu0 %v1979
  %v2043 = vpop.xlane.xlu0 %2042
  %2044 = vadd.xlane.f32.xlu0 %v1981
  %v2045 = vpop.xlane.xlu0 %2044
  %2046 = vadd.xlane.f32.xlu0 %v1983
  %v2047 = vpop.xlane.xlu0 %2046
  %2048 = vadd.xlane.f32.xlu0 %v1985
  %v2049 = vpop.xlane.xlu0 %2048
  %2050 = vadd.xlane.f32.xlu0 %v1987
  %v2051 = vpop.xlane.xlu0 %2050
  %2052 = vadd.xlane.f32.xlu0 %v1989
  %v2053 = vpop.xlane.xlu0 %2052
  %2054 = vadd.xlane.f32.xlu0 %v1991
  %v2055 = vpop.xlane.xlu0 %2054
  %2056 = vadd.xlane.f32.xlu0 %v1993
  %v2057 = vpop.xlane.xlu0 %2056
  %2058 = vadd.xlane.f32.xlu0 %v1995
  %v2059 = vpop.xlane.xlu0 %2058
  %2060 = vadd.xlane.f32.xlu0 %v1997
  %v2061 = vpop.xlane.xlu0 %2060
  %2062 = vadd.xlane.f32.xlu0 %v1999
  %v2063 = vpop.xlane.xlu0 %2062
  %2064 = vadd.xlane.f32.xlu0 %v2001
  %v2065 = vpop.xlane.xlu0 %2064
  %2066 = vadd.xlane.f32.xlu0 %v2003
  %v2067 = vpop.xlane.xlu0 %2066
  %2068 = vadd.xlane.f32.xlu0 %v2005
  %v2069 = vpop.xlane.xlu0 %2068
  %2070 = vadd.xlane.f32.xlu0 %v2007
  %v2071 = vpop.xlane.xlu0 %2070
  %2072 = vadd.xlane.f32.xlu0 %v2009
  %v2073 = vpop.xlane.xlu0 %2072
  %2074 = vadd.xlane.f32.xlu0 %v2011
  %v2075 = vpop.xlane.xlu0 %2074
  %2076 = vadd.xlane.f32.xlu0 %v2013
  %v2077 = vpop.xlane.xlu0 %2076
  %2078 = vadd.xlane.f32.xlu0 %v2015
  %v2079 = vpop.xlane.xlu0 %2078
  %2080 = vadd.xlane.f32.xlu0 %v2017
  %v2081 = vpop.xlane.xlu0 %2080
  %2082 = vadd.xlane.f32.xlu0 %v2019
  %v2083 = vpop.xlane.xlu0 %2082
  %2084 = vadd.xlane.f32.xlu0 %v2021
  %v2085 = vpop.xlane.xlu0 %2084
  %2086 = vadd.xlane.f32.xlu0 %v2023
  %v2087 = vpop.xlane.xlu0 %2086
  %v2088 = vrcp.pop %v2025
  %v2089 = vrcp.pop %v2027
  %v2090 = vrcp.pop %v2029
  %v2091 = vrcp.pop %v2031
  %v2092 = vrcp.pop %v2033
  %v2093 = vrcp.pop %v2035
  %v2094 = vrcp.pop %v2037
  %v2095 = vrcp.pop %v2039
  %v2096 = vrcp.pop %v2041
  %v2097 = vrcp.pop %v2043
  %v2098 = vrcp.pop %v2045
  %v2099 = vrcp.pop %v2047
  %v2100 = vrcp.pop %v2049
  %v2101 = vrcp.pop %v2051
  %v2102 = vrcp.pop %v2053
  %v2103 = vrcp.pop %v2055
  %v2104 = vrcp.pop %v2057
  %v2105 = vrcp.pop %v2059
  %v2106 = vrcp.pop %v2061
  %v2107 = vrcp.pop %v2063
  %v2108 = vrcp.pop %v2065
  %v2109 = vrcp.pop %v2067
  %v2110 = vrcp.pop %v2069
  %v2111 = vrcp.pop %v2071
  %v2112 = vrcp.pop %v2073
  %v2113 = vrcp.pop %v2075
  %v2114 = vrcp.pop %v2077
  %v2115 = vrcp.pop %v2079
  %v2116 = vrcp.pop %v2081
  %v2117 = vrcp.pop %v2083
  %v2118 = vrcp.pop %v2085
  %v2119 = vrcp.pop %v2087
  %v2120 = vmul.f32 %v1961, %v2088
  %v2121 = vmul.f32 %v1963, %v2089
  %v2122 = vmul.f32 %v1965, %v2090
  %v2123 = vmul.f32 %v1967, %v2091
  %v2124 = vmul.f32 %v1969, %v2092
  %v2125 = vmul.f32 %v1971, %v2093
  %v2126 = vmul.f32 %v1973, %v2094
  %v2127 = vmul.f32 %v1975, %v2095
  %v2128 = vmul.f32 %v1977, %v2096
  %v2129 = vmul.f32 %v1979, %v2097
  %v2130 = vmul.f32 %v1981, %v2098
  %v2131 = vmul.f32 %v1983, %v2099
  %v2132 = vmul.f32 %v1985, %v2100
  %v2133 = vmul.f32 %v1987, %v2101
  %v2134 = vmul.f32 %v1989, %v2102
  %v2135 = vmul.f32 %v1991, %v2103
  %v2136 = vmul.f32 %v1993, %v2104
  %v2137 = vmul.f32 %v1995, %v2105
  %v2138 = vmul.f32 %v1997, %v2106
  %v2139 = vmul.f32 %v1999, %v2107
  %v2140 = vmul.f32 %v2001, %v2108
  %v2141 = vmul.f32 %v2003, %v2109
  %v2142 = vmul.f32 %v2005, %v2110
  %v2143 = vmul.f32 %v2007, %v2111
  %v2144 = vmul.f32 %v2009, %v2112
  %v2145 = vmul.f32 %v2011, %v2113
  %v2146 = vmul.f32 %v2013, %v2114
  %v2147 = vmul.f32 %v2015, %v2115
  %v2148 = vmul.f32 %v2017, %v2116
  %v2149 = vmul.f32 %v2019, %v2117
  %v2150 = vmul.f32 %v2021, %v2118
  %v2151 = vmul.f32 %v2023, %v2119
  %s2152 = scalar_lea.vmem %s6, 256
  %2153 = vst [vmem:[%s2152] sm:$0xff] %v2120
  %2154 = vst [vmem:[%s2152 + $0x8] sm:$0xff] %v2121
  %2155 = vst [vmem:[%s2152 + $0x10] sm:$0xff] %v2122
  %2156 = vst [vmem:[%s2152 + $0x18] sm:$0xff] %v2123
  %2157 = vst [vmem:[%s2152 + $0x20] sm:$0xff] %v2124
  %2158 = vst [vmem:[%s2152 + $0x28] sm:$0xff] %v2125
  %2159 = vst [vmem:[%s2152 + $0x30] sm:$0xff] %v2126
  %2160 = vst [vmem:[%s2152 + $0x38] sm:$0xff] %v2127
  %2161 = vst [vmem:[%s2152 + $0x40] sm:$0xff] %v2128
  %2162 = vst [vmem:[%s2152 + $0x48] sm:$0xff] %v2129
  %2163 = vst [vmem:[%s2152 + $0x50] sm:$0xff] %v2130
  %2164 = vst [vmem:[%s2152 + $0x58] sm:$0xff] %v2131
  %2165 = vst [vmem:[%s2152 + $0x60] sm:$0xff] %v2132
  %2166 = vst [vmem:[%s2152 + $0x68] sm:$0xff] %v2133
  %2167 = vst [vmem:[%s2152 + $0x70] sm:$0xff] %v2134
  %2168 = vst [vmem:[%s2152 + $0x78] sm:$0xff] %v2135
  %2169 = vst [vmem:[%s2152 + $0x80] sm:$0xff] %v2136
  %2170 = vst [vmem:[%s2152 + $0x88] sm:$0xff] %v2137
  %2171 = vst [vmem:[%s2152 + $0x90] sm:$0xff] %v2138
  %2172 = vst [vmem:[%s2152 + $0x98] sm:$0xff] %v2139
  %2173 = vst [vmem:[%s2152 + $0xa0] sm:$0xff] %v2140
  %2174 = vst [vmem:[%s2152 + $0xa8] sm:$0xff] %v2141
  %2175 = vst [vmem:[%s2152 + $0xb0] sm:$0xff] %v2142
  %2176 = vst [vmem:[%s2152 + $0xb8] sm:$0xff] %v2143
  %2177 = vst [vmem:[%s2152 + $0xc0] sm:$0xff] %v2144
  %2178 = vst [vmem:[%s2152 + $0xc8] sm:$0xff] %v2145
  %2179 = vst [vmem:[%s2152 + $0xd0] sm:$0xff] %v2146
  %2180 = vst [vmem:[%s2152 + $0xd8] sm:$0xff] %v2147
  %2181 = vst [vmem:[%s2152 + $0xe0] sm:$0xff] %v2148
  %2182 = vst [vmem:[%s2152 + $0xe8] sm:$0xff] %v2149
  %2183 = vst [vmem:[%s2152 + $0xf0] sm:$0xff] %v2150
  %2184 = vst [vmem:[%s2152 + $0xf8] sm:$0xff] %v2151
  %2185 = vmax.xlane.f32.xlu0 %v1354
  %v2186 = vpop.xlane.xlu0 %2185
  %2187 = vmax.xlane.f32.xlu0 %v1360
  %v2188 = vpop.xlane.xlu0 %2187
  %2189 = vmax.xlane.f32.xlu0 %v1366
  %v2190 = vpop.xlane.xlu0 %2189
  %2191 = vmax.xlane.f32.xlu0 %v1372
  %v2192 = vpop.xlane.xlu0 %2191
  %2193 = vmax.xlane.f32.xlu0 %v1378
  %v2194 = vpop.xlane.xlu0 %2193
  %2195 = vmax.xlane.f32.xlu0 %v1384
  %v2196 = vpop.xlane.xlu0 %2195
  %2197 = vmax.xlane.f32.xlu0 %v1390
  %v2198 = vpop.xlane.xlu0 %2197
  %2199 = vmax.xlane.f32.xlu0 %v1396
  %v2200 = vpop.xlane.xlu0 %2199
  %2201 = vmax.xlane.f32.xlu0 %v1402
  %v2202 = vpop.xlane.xlu0 %2201
  %2203 = vmax.xlane.f32.xlu0 %v1408
  %v2204 = vpop.xlane.xlu0 %2203
  %2205 = vmax.xlane.f32.xlu0 %v1414
  %v2206 = vpop.xlane.xlu0 %2205
  %2207 = vmax.xlane.f32.xlu0 %v1420
  %v2208 = vpop.xlane.xlu0 %2207
  %2209 = vmax.xlane.f32.xlu0 %v1426
  %v2210 = vpop.xlane.xlu0 %2209
  %2211 = vmax.xlane.f32.xlu0 %v1432
  %v2212 = vpop.xlane.xlu0 %2211
  %2213 = vmax.xlane.f32.xlu0 %v1438
  %v2214 = vpop.xlane.xlu0 %2213
  %2215 = vmax.xlane.f32.xlu0 %v1444
  %v2216 = vpop.xlane.xlu0 %2215
  %2217 = vmax.xlane.f32.xlu0 %v1450
  %v2218 = vpop.xlane.xlu0 %2217
  %2219 = vmax.xlane.f32.xlu0 %v1456
  %v2220 = vpop.xlane.xlu0 %2219
  %2221 = vmax.xlane.f32.xlu0 %v1462
  %v2222 = vpop.xlane.xlu0 %2221
  %2223 = vmax.xlane.f32.xlu0 %v1468
  %v2224 = vpop.xlane.xlu0 %2223
  %2225 = vmax.xlane.f32.xlu0 %v1474
  %v2226 = vpop.xlane.xlu0 %2225
  %2227 = vmax.xlane.f32.xlu0 %v1480
  %v2228 = vpop.xlane.xlu0 %2227
  %2229 = vmax.xlane.f32.xlu0 %v1486
  %v2230 = vpop.xlane.xlu0 %2229
  %2231 = vmax.xlane.f32.xlu0 %v1492
  %v2232 = vpop.xlane.xlu0 %2231
  %2233 = vmax.xlane.f32.xlu0 %v1498
  %v2234 = vpop.xlane.xlu0 %2233
  %2235 = vmax.xlane.f32.xlu0 %v1504
  %v2236 = vpop.xlane.xlu0 %2235
  %2237 = vmax.xlane.f32.xlu0 %v1510
  %v2238 = vpop.xlane.xlu0 %2237
  %2239 = vmax.xlane.f32.xlu0 %v1516
  %v2240 = vpop.xlane.xlu0 %2239
  %2241 = vmax.xlane.f32.xlu0 %v1522
  %v2242 = vpop.xlane.xlu0 %2241
  %2243 = vmax.xlane.f32.xlu0 %v1528
  %v2244 = vpop.xlane.xlu0 %2243
  %2245 = vmax.xlane.f32.xlu0 %v1534
  %v2246 = vpop.xlane.xlu0 %2245
  %2247 = vmax.xlane.f32.xlu0 %v1540
  %v2248 = vpop.xlane.xlu0 %2247
  %v2249 = vsub.f32 %v1354, %v2186
  %v2250 = vsub.f32 %v1360, %v2188
  %v2251 = vsub.f32 %v1366, %v2190
  %v2252 = vsub.f32 %v1372, %v2192
  %v2253 = vsub.f32 %v1378, %v2194
  %v2254 = vsub.f32 %v1384, %v2196
  %v2255 = vsub.f32 %v1390, %v2198
  %v2256 = vsub.f32 %v1396, %v2200
  %v2257 = vsub.f32 %v1402, %v2202
  %v2258 = vsub.f32 %v1408, %v2204
  %v2259 = vsub.f32 %v1414, %v2206
  %v2260 = vsub.f32 %v1420, %v2208
  %v2261 = vsub.f32 %v1426, %v2210
  %v2262 = vsub.f32 %v1432, %v2212
  %v2263 = vsub.f32 %v1438, %v2214
  %v2264 = vsub.f32 %v1444, %v2216
  %v2265 = vsub.f32 %v1450, %v2218
  %v2266 = vsub.f32 %v1456, %v2220
  %v2267 = vsub.f32 %v1462, %v2222
  %v2268 = vsub.f32 %v1468, %v2224
  %v2269 = vsub.f32 %v1474, %v2226
  %v2270 = vsub.f32 %v1480, %v2228
  %v2271 = vsub.f32 %v1486, %v2230
  %v2272 = vsub.f32 %v1492, %v2232
  %v2273 = vsub.f32 %v1498, %v2234
  %v2274 = vsub.f32 %v1504, %v2236
  %v2275 = vsub.f32 %v1510, %v2238
  %v2276 = vsub.f32 %v1516, %v2240
  %v2277 = vsub.f32 %v1522, %v2242
  %v2278 = vsub.f32 %v1528, %v2244
  %v2279 = vsub.f32 %v1534, %v2246
  %v2280 = vsub.f32 %v1540, %v2248
  %v2281 = vmul.f32 %v2249, 1.442695
  %v2282 = vpow.pop %v2281
  %v2283 = vmul.f32 %v2250, 1.442695
  %v2284 = vpow.pop %v2283
  %v2285 = vmul.f32 %v2251, 1.442695
  %v2286 = vpow.pop %v2285
  %v2287 = vmul.f32 %v2252, 1.442695
  %v2288 = vpow.pop %v2287
  %v2289 = vmul.f32 %v2253, 1.442695
  %v2290 = vpow.pop %v2289
  %v2291 = vmul.f32 %v2254, 1.442695
  %v2292 = vpow.pop %v2291
  %v2293 = vmul.f32 %v2255, 1.442695
  %v2294 = vpow.pop %v2293
  %v2295 = vmul.f32 %v2256, 1.442695
  %v2296 = vpow.pop %v2295
  %v2297 = vmul.f32 %v2257, 1.442695
  %v2298 = vpow.pop %v2297
  %v2299 = vmul.f32 %v2258, 1.442695
  %v2300 = vpow.pop %v2299
  %v2301 = vmul.f32 %v2259, 1.442695
  %v2302 = vpow.pop %v2301
  %v2303 = vmul.f32 %v2260, 1.442695
  %v2304 = vpow.pop %v2303
  %v2305 = vmul.f32 %v2261, 1.442695
  %v2306 = vpow.pop %v2305
  %v2307 = vmul.f32 %v2262, 1.442695
  %v2308 = vpow.pop %v2307
  %v2309 = vmul.f32 %v2263, 1.442695
  %v2310 = vpow.pop %v2309
  %v2311 = vmul.f32 %v2264, 1.442695
  %v2312 = vpow.pop %v2311
  %v2313 = vmul.f32 %v2265, 1.442695
  %v2314 = vpow.pop %v2313
  %v2315 = vmul.f32 %v2266, 1.442695
  %v2316 = vpow.pop %v2315
  %v2317 = vmul.f32 %v2267, 1.442695
  %v2318 = vpow.pop %v2317
  %v2319 = vmul.f32 %v2268, 1.442695
  %v2320 = vpow.pop %v2319
  %v2321 = vmul.f32 %v2269, 1.442695
  %v2322 = vpow.pop %v2321
  %v2323 = vmul.f32 %v2270, 1.442695
  %v2324 = vpow.pop %v2323
  %v2325 = vmul.f32 %v2271, 1.442695
  %v2326 = vpow.pop %v2325
  %v2327 = vmul.f32 %v2272, 1.442695
  %v2328 = vpow.pop %v2327
  %v2329 = vmul.f32 %v2273, 1.442695
  %v2330 = vpow.pop %v2329
  %v2331 = vmul.f32 %v2274, 1.442695
  %v2332 = vpow.pop %v2331
  %v2333 = vmul.f32 %v2275, 1.442695
  %v2334 = vpow.pop %v2333
  %v2335 = vmul.f32 %v2276, 1.442695
  %v2336 = vpow.pop %v2335
  %v2337 = vmul.f32 %v2277, 1.442695
  %v2338 = vpow.pop %v2337
  %v2339 = vmul.f32 %v2278, 1.442695
  %v2340 = vpow.pop %v2339
  %v2341 = vmul.f32 %v2279, 1.442695
  %v2342 = vpow.pop %v2341
  %v2343 = vmul.f32 %v2280, 1.442695
  %v2344 = vpow.pop %v2343
  %2345 = vadd.xlane.f32.xlu0 %v2282
  %v2346 = vpop.xlane.xlu0 %2345
  %2347 = vadd.xlane.f32.xlu0 %v2284
  %v2348 = vpop.xlane.xlu0 %2347
  %2349 = vadd.xlane.f32.xlu0 %v2286
  %v2350 = vpop.xlane.xlu0 %2349
  %2351 = vadd.xlane.f32.xlu0 %v2288
  %v2352 = vpop.xlane.xlu0 %2351
  %2353 = vadd.xlane.f32.xlu0 %v2290
  %v2354 = vpop.xlane.xlu0 %2353
  %2355 = vadd.xlane.f32.xlu0 %v2292
  %v2356 = vpop.xlane.xlu0 %2355
  %2357 = vadd.xlane.f32.xlu0 %v2294
  %v2358 = vpop.xlane.xlu0 %2357
  %2359 = vadd.xlane.f32.xlu0 %v2296
  %v2360 = vpop.xlane.xlu0 %2359
  %2361 = vadd.xlane.f32.xlu0 %v2298
  %v2362 = vpop.xlane.xlu0 %2361
  %2363 = vadd.xlane.f32.xlu0 %v2300
  %v2364 = vpop.xlane.xlu0 %2363
  %2365 = vadd.xlane.f32.xlu0 %v2302
  %v2366 = vpop.xlane.xlu0 %2365
  %2367 = vadd.xlane.f32.xlu0 %v2304
  %v2368 = vpop.xlane.xlu0 %2367
  %2369 = vadd.xlane.f32.xlu0 %v2306
  %v2370 = vpop.xlane.xlu0 %2369
  %2371 = vadd.xlane.f32.xlu0 %v2308
  %v2372 = vpop.xlane.xlu0 %2371
  %2373 = vadd.xlane.f32.xlu0 %v2310
  %v2374 = vpop.xlane.xlu0 %2373
  %2375 = vadd.xlane.f32.xlu0 %v2312
  %v2376 = vpop.xlane.xlu0 %2375
  %2377 = vadd.xlane.f32.xlu0 %v2314
  %v2378 = vpop.xlane.xlu0 %2377
  %2379 = vadd.xlane.f32.xlu0 %v2316
  %v2380 = vpop.xlane.xlu0 %2379
  %2381 = vadd.xlane.f32.xlu0 %v2318
  %v2382 = vpop.xlane.xlu0 %2381
  %2383 = vadd.xlane.f32.xlu0 %v2320
  %v2384 = vpop.xlane.xlu0 %2383
  %2385 = vadd.xlane.f32.xlu0 %v2322
  %v2386 = vpop.xlane.xlu0 %2385
  %2387 = vadd.xlane.f32.xlu0 %v2324
  %v2388 = vpop.xlane.xlu0 %2387
  %2389 = vadd.xlane.f32.xlu0 %v2326
  %v2390 = vpop.xlane.xlu0 %2389
  %2391 = vadd.xlane.f32.xlu0 %v2328
  %v2392 = vpop.xlane.xlu0 %2391
  %2393 = vadd.xlane.f32.xlu0 %v2330
  %v2394 = vpop.xlane.xlu0 %2393
  %2395 = vadd.xlane.f32.xlu0 %v2332
  %v2396 = vpop.xlane.xlu0 %2395
  %2397 = vadd.xlane.f32.xlu0 %v2334
  %v2398 = vpop.xlane.xlu0 %2397
  %2399 = vadd.xlane.f32.xlu0 %v2336
  %v2400 = vpop.xlane.xlu0 %2399
  %2401 = vadd.xlane.f32.xlu0 %v2338
  %v2402 = vpop.xlane.xlu0 %2401
  %2403 = vadd.xlane.f32.xlu0 %v2340
  %v2404 = vpop.xlane.xlu0 %2403
  %2405 = vadd.xlane.f32.xlu0 %v2342
  %v2406 = vpop.xlane.xlu0 %2405
  %2407 = vadd.xlane.f32.xlu0 %v2344
  %v2408 = vpop.xlane.xlu0 %2407
  %v2409 = vrcp.pop %v2346
  %v2410 = vrcp.pop %v2348
  %v2411 = vrcp.pop %v2350
  %v2412 = vrcp.pop %v2352
  %v2413 = vrcp.pop %v2354
  %v2414 = vrcp.pop %v2356
  %v2415 = vrcp.pop %v2358
  %v2416 = vrcp.pop %v2360
  %v2417 = vrcp.pop %v2362
  %v2418 = vrcp.pop %v2364
  %v2419 = vrcp.pop %v2366
  %v2420 = vrcp.pop %v2368
  %v2421 = vrcp.pop %v2370
  %v2422 = vrcp.pop %v2372
  %v2423 = vrcp.pop %v2374
  %v2424 = vrcp.pop %v2376
  %v2425 = vrcp.pop %v2378
  %v2426 = vrcp.pop %v2380
  %v2427 = vrcp.pop %v2382
  %v2428 = vrcp.pop %v2384
  %v2429 = vrcp.pop %v2386
  %v2430 = vrcp.pop %v2388
  %v2431 = vrcp.pop %v2390
  %v2432 = vrcp.pop %v2392
  %v2433 = vrcp.pop %v2394
  %v2434 = vrcp.pop %v2396
  %v2435 = vrcp.pop %v2398
  %v2436 = vrcp.pop %v2400
  %v2437 = vrcp.pop %v2402
  %v2438 = vrcp.pop %v2404
  %v2439 = vrcp.pop %v2406
  %v2440 = vrcp.pop %v2408
  %v2441 = vmul.f32 %v2282, %v2409
  %v2442 = vmul.f32 %v2284, %v2410
  %v2443 = vmul.f32 %v2286, %v2411
  %v2444 = vmul.f32 %v2288, %v2412
  %v2445 = vmul.f32 %v2290, %v2413
  %v2446 = vmul.f32 %v2292, %v2414
  %v2447 = vmul.f32 %v2294, %v2415
  %v2448 = vmul.f32 %v2296, %v2416
  %v2449 = vmul.f32 %v2298, %v2417
  %v2450 = vmul.f32 %v2300, %v2418
  %v2451 = vmul.f32 %v2302, %v2419
  %v2452 = vmul.f32 %v2304, %v2420
  %v2453 = vmul.f32 %v2306, %v2421
  %v2454 = vmul.f32 %v2308, %v2422
  %v2455 = vmul.f32 %v2310, %v2423
  %v2456 = vmul.f32 %v2312, %v2424
  %v2457 = vmul.f32 %v2314, %v2425
  %v2458 = vmul.f32 %v2316, %v2426
  %v2459 = vmul.f32 %v2318, %v2427
  %v2460 = vmul.f32 %v2320, %v2428
  %v2461 = vmul.f32 %v2322, %v2429
  %v2462 = vmul.f32 %v2324, %v2430
  %v2463 = vmul.f32 %v2326, %v2431
  %v2464 = vmul.f32 %v2328, %v2432
  %v2465 = vmul.f32 %v2330, %v2433
  %v2466 = vmul.f32 %v2332, %v2434
  %v2467 = vmul.f32 %v2334, %v2435
  %v2468 = vmul.f32 %v2336, %v2436
  %v2469 = vmul.f32 %v2338, %v2437
  %v2470 = vmul.f32 %v2340, %v2438
  %v2471 = vmul.f32 %v2342, %v2439
  %v2472 = vmul.f32 %v2344, %v2440
  %s2473 = scalar_lea.vmem %s6, 512
  %2474 = vst [vmem:[%s2473] sm:$0xff] %v2441
  %2475 = vst [vmem:[%s2473 + $0x8] sm:$0xff] %v2442
  %2476 = vst [vmem:[%s2473 + $0x10] sm:$0xff] %v2443
  %2477 = vst [vmem:[%s2473 + $0x18] sm:$0xff] %v2444
  %2478 = vst [vmem:[%s2473 + $0x20] sm:$0xff] %v2445
  %2479 = vst [vmem:[%s2473 + $0x28] sm:$0xff] %v2446
  %2480 = vst [vmem:[%s2473 + $0x30] sm:$0xff] %v2447
  %2481 = vst [vmem:[%s2473 + $0x38] sm:$0xff] %v2448
  %2482 = vst [vmem:[%s2473 + $0x40] sm:$0xff] %v2449
  %2483 = vst [vmem:[%s2473 + $0x48] sm:$0xff] %v2450
  %2484 = vst [vmem:[%s2473 + $0x50] sm:$0xff] %v2451
  %2485 = vst [vmem:[%s2473 + $0x58] sm:$0xff] %v2452
  %2486 = vst [vmem:[%s2473 + $0x60] sm:$0xff] %v2453
  %2487 = vst [vmem:[%s2473 + $0x68] sm:$0xff] %v2454
  %2488 = vst [vmem:[%s2473 + $0x70] sm:$0xff] %v2455
  %2489 = vst [vmem:[%s2473 + $0x78] sm:$0xff] %v2456
  %2490 = vst [vmem:[%s2473 + $0x80] sm:$0xff] %v2457
  %2491 = vst [vmem:[%s2473 + $0x88] sm:$0xff] %v2458
  %2492 = vst [vmem:[%s2473 + $0x90] sm:$0xff] %v2459
  %2493 = vst [vmem:[%s2473 + $0x98] sm:$0xff] %v2460
  %2494 = vst [vmem:[%s2473 + $0xa0] sm:$0xff] %v2461
  %2495 = vst [vmem:[%s2473 + $0xa8] sm:$0xff] %v2462
  %2496 = vst [vmem:[%s2473 + $0xb0] sm:$0xff] %v2463
  %2497 = vst [vmem:[%s2473 + $0xb8] sm:$0xff] %v2464
  %2498 = vst [vmem:[%s2473 + $0xc0] sm:$0xff] %v2465
  %2499 = vst [vmem:[%s2473 + $0xc8] sm:$0xff] %v2466
  %2500 = vst [vmem:[%s2473 + $0xd0] sm:$0xff] %v2467
  %2501 = vst [vmem:[%s2473 + $0xd8] sm:$0xff] %v2468
  %2502 = vst [vmem:[%s2473 + $0xe0] sm:$0xff] %v2469
  %2503 = vst [vmem:[%s2473 + $0xe8] sm:$0xff] %v2470
  %2504 = vst [vmem:[%s2473 + $0xf0] sm:$0xff] %v2471
  %2505 = vst [vmem:[%s2473 + $0xf8] sm:$0xff] %v2472
  %v2506 = vsub.f32 0.0, %v1356
  %v2507 = vsub.f32 0.0, %v1362
  %v2508 = vsub.f32 0.0, %v1368
  %v2509 = vsub.f32 0.0, %v1374
  %v2510 = vsub.f32 0.0, %v1380
  %v2511 = vsub.f32 0.0, %v1386
  %v2512 = vsub.f32 0.0, %v1392
  %v2513 = vsub.f32 0.0, %v1398
  %v2514 = vsub.f32 0.0, %v1404
  %v2515 = vsub.f32 0.0, %v1410
  %v2516 = vsub.f32 0.0, %v1416
  %v2517 = vsub.f32 0.0, %v1422
  %v2518 = vsub.f32 0.0, %v1428
  %v2519 = vsub.f32 0.0, %v1434
  %v2520 = vsub.f32 0.0, %v1440
  %v2521 = vsub.f32 0.0, %v1446
  %v2522 = vsub.f32 0.0, %v1452
  %v2523 = vsub.f32 0.0, %v1458
  %v2524 = vsub.f32 0.0, %v1464
  %v2525 = vsub.f32 0.0, %v1470
  %v2526 = vsub.f32 0.0, %v1476
  %v2527 = vsub.f32 0.0, %v1482
  %v2528 = vsub.f32 0.0, %v1488
  %v2529 = vsub.f32 0.0, %v1494
  %v2530 = vsub.f32 0.0, %v1500
  %v2531 = vsub.f32 0.0, %v1506
  %v2532 = vsub.f32 0.0, %v1512
  %v2533 = vsub.f32 0.0, %v1518
  %v2534 = vsub.f32 0.0, %v1524
  %v2535 = vsub.f32 0.0, %v1530
  %v2536 = vsub.f32 0.0, %v1536
  %v2537 = vsub.f32 0.0, %v1542
  %v2538 = vmul.f32 %v2506, 1.442695
  %v2539 = vpow.pop %v2538
  %v2540 = vmul.f32 %v2507, 1.442695
  %v2541 = vpow.pop %v2540
  %v2542 = vmul.f32 %v2508, 1.442695
  %v2543 = vpow.pop %v2542
  %v2544 = vmul.f32 %v2509, 1.442695
  %v2545 = vpow.pop %v2544
  %v2546 = vmul.f32 %v2510, 1.442695
  %v2547 = vpow.pop %v2546
  %v2548 = vmul.f32 %v2511, 1.442695
  %v2549 = vpow.pop %v2548
  %v2550 = vmul.f32 %v2512, 1.442695
  %v2551 = vpow.pop %v2550
  %v2552 = vmul.f32 %v2513, 1.442695
  %v2553 = vpow.pop %v2552
  %v2554 = vmul.f32 %v2514, 1.442695
  %v2555 = vpow.pop %v2554
  %v2556 = vmul.f32 %v2515, 1.442695
  %v2557 = vpow.pop %v2556
  %v2558 = vmul.f32 %v2516, 1.442695
  %v2559 = vpow.pop %v2558
  %v2560 = vmul.f32 %v2517, 1.442695
  %v2561 = vpow.pop %v2560
  %v2562 = vmul.f32 %v2518, 1.442695
  %v2563 = vpow.pop %v2562
  %v2564 = vmul.f32 %v2519, 1.442695
  %v2565 = vpow.pop %v2564
  %v2566 = vmul.f32 %v2520, 1.442695
  %v2567 = vpow.pop %v2566
  %v2568 = vmul.f32 %v2521, 1.442695
  %v2569 = vpow.pop %v2568
  %v2570 = vmul.f32 %v2522, 1.442695
  %v2571 = vpow.pop %v2570
  %v2572 = vmul.f32 %v2523, 1.442695
  %v2573 = vpow.pop %v2572
  %v2574 = vmul.f32 %v2524, 1.442695
  %v2575 = vpow.pop %v2574
  %v2576 = vmul.f32 %v2525, 1.442695
  %v2577 = vpow.pop %v2576
  %v2578 = vmul.f32 %v2526, 1.442695
  %v2579 = vpow.pop %v2578
  %v2580 = vmul.f32 %v2527, 1.442695
  %v2581 = vpow.pop %v2580
  %v2582 = vmul.f32 %v2528, 1.442695
  %v2583 = vpow.pop %v2582
  %v2584 = vmul.f32 %v2529, 1.442695
  %v2585 = vpow.pop %v2584
  %v2586 = vmul.f32 %v2530, 1.442695
  %v2587 = vpow.pop %v2586
  %v2588 = vmul.f32 %v2531, 1.442695
  %v2589 = vpow.pop %v2588
  %v2590 = vmul.f32 %v2532, 1.442695
  %v2591 = vpow.pop %v2590
  %v2592 = vmul.f32 %v2533, 1.442695
  %v2593 = vpow.pop %v2592
  %v2594 = vmul.f32 %v2534, 1.442695
  %v2595 = vpow.pop %v2594
  %v2596 = vmul.f32 %v2535, 1.442695
  %v2597 = vpow.pop %v2596
  %v2598 = vmul.f32 %v2536, 1.442695
  %v2599 = vpow.pop %v2598
  %v2600 = vmul.f32 %v2537, 1.442695
  %v2601 = vpow.pop %v2600
  %v2602 = vadd.f32 %v2539, 1.0
  %v2603 = vadd.f32 %v2541, 1.0
  %v2604 = vadd.f32 %v2543, 1.0
  %v2605 = vadd.f32 %v2545, 1.0
  %v2606 = vadd.f32 %v2547, 1.0
  %v2607 = vadd.f32 %v2549, 1.0
  %v2608 = vadd.f32 %v2551, 1.0
  %v2609 = vadd.f32 %v2553, 1.0
  %v2610 = vadd.f32 %v2555, 1.0
  %v2611 = vadd.f32 %v2557, 1.0
  %v2612 = vadd.f32 %v2559, 1.0
  %v2613 = vadd.f32 %v2561, 1.0
  %v2614 = vadd.f32 %v2563, 1.0
  %v2615 = vadd.f32 %v2565, 1.0
  %v2616 = vadd.f32 %v2567, 1.0
  %v2617 = vadd.f32 %v2569, 1.0
  %v2618 = vadd.f32 %v2571, 1.0
  %v2619 = vadd.f32 %v2573, 1.0
  %v2620 = vadd.f32 %v2575, 1.0
  %v2621 = vadd.f32 %v2577, 1.0
  %v2622 = vadd.f32 %v2579, 1.0
  %v2623 = vadd.f32 %v2581, 1.0
  %v2624 = vadd.f32 %v2583, 1.0
  %v2625 = vadd.f32 %v2585, 1.0
  %v2626 = vadd.f32 %v2587, 1.0
  %v2627 = vadd.f32 %v2589, 1.0
  %v2628 = vadd.f32 %v2591, 1.0
  %v2629 = vadd.f32 %v2593, 1.0
  %v2630 = vadd.f32 %v2595, 1.0
  %v2631 = vadd.f32 %v2597, 1.0
  %v2632 = vadd.f32 %v2599, 1.0
  %v2633 = vadd.f32 %v2601, 1.0
  %v2634 = vrcp.pop %v2602
  %v2635 = vrcp.pop %v2603
  %v2636 = vrcp.pop %v2604
  %v2637 = vrcp.pop %v2605
  %v2638 = vrcp.pop %v2606
  %v2639 = vrcp.pop %v2607
  %v2640 = vrcp.pop %v2608
  %v2641 = vrcp.pop %v2609
  %v2642 = vrcp.pop %v2610
  %v2643 = vrcp.pop %v2611
  %v2644 = vrcp.pop %v2612
  %v2645 = vrcp.pop %v2613
  %v2646 = vrcp.pop %v2614
  %v2647 = vrcp.pop %v2615
  %v2648 = vrcp.pop %v2616
  %v2649 = vrcp.pop %v2617
  %v2650 = vrcp.pop %v2618
  %v2651 = vrcp.pop %v2619
  %v2652 = vrcp.pop %v2620
  %v2653 = vrcp.pop %v2621
  %v2654 = vrcp.pop %v2622
  %v2655 = vrcp.pop %v2623
  %v2656 = vrcp.pop %v2624
  %v2657 = vrcp.pop %v2625
  %v2658 = vrcp.pop %v2626
  %v2659 = vrcp.pop %v2627
  %v2660 = vrcp.pop %v2628
  %v2661 = vrcp.pop %v2629
  %v2662 = vrcp.pop %v2630
  %v2663 = vrcp.pop %v2631
  %v2664 = vrcp.pop %v2632
  %v2665 = vrcp.pop %v2633
  %s2666 = scalar_lea.vmem %s6, 768
  %2667 = vst [vmem:[%s2666] sm:$0xff] %v2634
  %2668 = vst [vmem:[%s2666 + $0x8] sm:$0xff] %v2635
  %2669 = vst [vmem:[%s2666 + $0x10] sm:$0xff] %v2636
  %2670 = vst [vmem:[%s2666 + $0x18] sm:$0xff] %v2637
  %2671 = vst [vmem:[%s2666 + $0x20] sm:$0xff] %v2638
  %2672 = vst [vmem:[%s2666 + $0x28] sm:$0xff] %v2639
  %2673 = vst [vmem:[%s2666 + $0x30] sm:$0xff] %v2640
  %2674 = vst [vmem:[%s2666 + $0x38] sm:$0xff] %v2641
  %2675 = vst [vmem:[%s2666 + $0x40] sm:$0xff] %v2642
  %2676 = vst [vmem:[%s2666 + $0x48] sm:$0xff] %v2643
  %2677 = vst [vmem:[%s2666 + $0x50] sm:$0xff] %v2644
  %2678 = vst [vmem:[%s2666 + $0x58] sm:$0xff] %v2645
  %2679 = vst [vmem:[%s2666 + $0x60] sm:$0xff] %v2646
  %2680 = vst [vmem:[%s2666 + $0x68] sm:$0xff] %v2647
  %2681 = vst [vmem:[%s2666 + $0x70] sm:$0xff] %v2648
  %2682 = vst [vmem:[%s2666 + $0x78] sm:$0xff] %v2649
  %2683 = vst [vmem:[%s2666 + $0x80] sm:$0xff] %v2650
  %2684 = vst [vmem:[%s2666 + $0x88] sm:$0xff] %v2651
  %2685 = vst [vmem:[%s2666 + $0x90] sm:$0xff] %v2652
  %2686 = vst [vmem:[%s2666 + $0x98] sm:$0xff] %v2653
  %2687 = vst [vmem:[%s2666 + $0xa0] sm:$0xff] %v2654
  %2688 = vst [vmem:[%s2666 + $0xa8] sm:$0xff] %v2655
  %2689 = vst [vmem:[%s2666 + $0xb0] sm:$0xff] %v2656
  %2690 = vst [vmem:[%s2666 + $0xb8] sm:$0xff] %v2657
  %2691 = vst [vmem:[%s2666 + $0xc0] sm:$0xff] %v2658
  %2692 = vst [vmem:[%s2666 + $0xc8] sm:$0xff] %v2659
  %2693 = vst [vmem:[%s2666 + $0xd0] sm:$0xff] %v2660
  %2694 = vst [vmem:[%s2666 + $0xd8] sm:$0xff] %v2661
  %2695 = vst [vmem:[%s2666 + $0xe0] sm:$0xff] %v2662
  %2696 = vst [vmem:[%s2666 + $0xe8] sm:$0xff] %v2663
  %2697 = vst [vmem:[%s2666 + $0xf0] sm:$0xff] %v2664
  %2698 = vst [vmem:[%s2666 + $0xf8] sm:$0xff] %v2665
  // Predicated region
  $region26: #{forward.1} parent=0 // pred_check
    _
  $region27: #{forward.1} parent=0 // pred_check_branch
    %2700 = sbr.rel (0) target = $region29
  $region28: #{forward.1} parent=0 // pred_region
    _
  $region29: #{forward.1} parent=0 // pred_fallthru
    _
  // Predicated region
  $region30: #{forward.1} parent=0 // pred_check
    _
  $region31: #{forward.1} parent=0 // pred_check_branch
    %2702 = sbr.rel (0) target = $region33
  $region32: #{forward.1} parent=0 // pred_region
    _
  $region33: #{forward.1} parent=0 // pred_fallthru
    _

</llo_original>
